<compile_context>
chip_gen: v7x
topology: tpu7x:2x2x1
jax: 0.10.0
libtpu: 0.0.40
codegen_flags: <defaults>
</compile_context>

<pallas_src>
import math

import jax
import jax.numpy as jnp
from jax import lax
from jax.experimental import pallas as pl
from jax.experimental.pallas import tpu as pltpu

LANE = 128  # lane width: pad the class dim so the final store is unmasked


def vanilla_rnn_kernel(x_ref, whx_ref, whh_ref, bh_ref, wph_ref, bp_ref,
                       out_ref, xproj_ref):
    T = x_ref.shape[0]
    B = x_ref.shape[1]
    H = whh_ref.shape[0]

    # ---- Hoisted off the serial chain: input projection + hidden bias, once. ----
    # (T, B, 1) * (1, 1, H) + (1, 1, H) -> (T, B, H)
    xproj_ref[...] = x_ref[...] * whx_ref[...] + bh_ref[...]

    # Hoisted weight load; re-fed to the MXU every step (weight-stationary
    # matmul_push_rhs driving would go further but jnp.dot keeps lowering simple).
    whh_t = whh_ref[...]

    def step(t, h):
        # Critical path per step: leading-axis ref index + MXU matmul + VPU add + EUP tanh.
        pre = xproj_ref[t] + jnp.dot(h, whh_t, preferred_element_type=jnp.float32)
        return jnp.tanh(pre)

    h0 = jnp.zeros((B, H), dtype=jnp.float32)
    # T is small and static: full unroll gives the scheduler cross-iteration visibility.
    h = lax.fori_loop(0, T, step, h0, unroll=True)

    # Final classifier; output tile is lane-dense (C padded to 128) -> unmasked store.
    p = jnp.dot(h, wph_ref[...], preferred_element_type=jnp.float32) + bp_ref[...]
    out_ref[...] = p.astype(out_ref.dtype)


def vanilla_rnn_forward(x, whx, whh, bias_h, wph, bias_p):
    """x: (B, T) f32.  whx: (H, 1), whh: (H, H), bias_h: (H,), wph: (C, H), bias_p: (C,)."""
    B, T = x.shape
    H = whh.shape[0]
    C = wph.shape[0]
    C_pad = ((C + LANE - 1) // LANE) * LANE

    # Layout plumbing in the wrapper (free): broadcast-ready shapes, lane-dense classes.
    x_tb1 = jnp.transpose(x).reshape(T, B, 1)                     # (T, B, 1)
    whx_t = jnp.transpose(whx).reshape(1, 1, H)                   # (1, 1, H)
    whh_t = jnp.transpose(whh)                                    # (H, H)
    bh = bias_h.reshape(1, 1, H)                                  # (1, 1, H)
    wph_pad = jnp.zeros((H, C_pad), jnp.float32).at[:, :C].set(jnp.transpose(wph))
    bp_pad = jnp.zeros((1, C_pad), jnp.float32).at[:, :C].set(bias_p.reshape(1, C))

    vmem = pl.BlockSpec(memory_space=pltpu.MemorySpace.VMEM)
    out_pad = pl.pallas_call(
        vanilla_rnn_kernel,
        out_shape=jax.ShapeDtypeStruct((B, C_pad), jnp.float32),
        in_specs=[vmem] * 6,
        out_specs=vmem,
        scratch_shapes=[pltpu.VMEM((T, B, H), jnp.float32)],      # precomputed x-projection
        compiler_params=pltpu.CompilerParams(vmem_limit_bytes=32 * 1024 * 1024),
    )(x_tb1, whx_t, whh_t, bh, wph_pad, bp_pad)
    return out_pad[:, :C]


def vanilla_rnn_reference(x, whx, whh, bias_h, wph, bias_p):
    """Pure-JAX mirror of the PyTorch forward."""
    h = jnp.zeros((1, whh.shape[0]), dtype=jnp.float32)
    T = x.shape[1]
    for t in range(T):
        x_t = x[:, t:t + 1]
        h = jnp.tanh(x_t @ whx.T + h @ whh.T + bias_h)
    return h @ wph.T + bias_p


if __name__ == "__main__":
    # Small shapes consistent with the module's forward: x is (batch, seq_length).
    batch_size, seq_length = 8, 16
    input_dim, num_hidden, num_classes = 1, 32, 10

    key = jax.random.PRNGKey(0)
    k_x, k_whx, k_whh, k_wph, k_bh, k_bp = jax.random.split(key, 6)

    stdv = 1.0 / math.sqrt(num_hidden)
    whx = jax.random.uniform(k_whx, (num_hidden, input_dim), jnp.float32, -stdv, stdv)
    whh = jax.random.uniform(k_whh, (num_hidden, num_hidden), jnp.float32, -stdv, stdv)
    wph = jax.random.uniform(k_wph, (num_classes, num_hidden), jnp.float32, -stdv, stdv)
    # Module inits biases to zero; use small random biases here so the bias paths are validated.
    bias_h = jax.random.uniform(k_bh, (num_hidden,), jnp.float32, -stdv, stdv)
    bias_p = jax.random.uniform(k_bp, (num_classes,), jnp.float32, -stdv, stdv)

    x = jax.random.normal(k_x, (batch_size, seq_length), jnp.float32)

    out = vanilla_rnn_forward(x, whx, whh, bias_h, wph, bias_p)
    out = jax.block_until_ready(out)

    ref = vanilla_rnn_reference(x, whx, whh, bias_h, wph, bias_p)
    assert out.shape == (batch_size, num_classes)
    assert jnp.allclose(out, ref, atol=1e-5, rtol=1e-5), "mismatch vs pure-JAX reference"

    print("KERNEL_OK")
</pallas_src>

<mosaic_0001>
module attributes {stable_mosaic.version = 11 : i64} {
  func.func @vanilla_rnn_kernel(%arg0: memref<16x8x1xf32, #tpu.memory_space<vmem>>, %arg1: memref<1x1x32xf32, #tpu.memory_space<vmem>>, %arg2: memref<32x32xf32, #tpu.memory_space<vmem>>, %arg3: memref<1x1x32xf32, #tpu.memory_space<vmem>>, %arg4: memref<32x128xf32, #tpu.memory_space<vmem>>, %arg5: memref<1x128xf32, #tpu.memory_space<vmem>>, %arg6: memref<8x128xf32, #tpu.memory_space<vmem>>, %arg7: memref<16x8x32xf32, #tpu.memory_space<vmem>>) attributes {dimension_semantics = [], scalar_prefetch = 0 : i64, scratch_operands = 1 : i64, tpu.core_type = #tpu.core_type<tc>} {
    %c0 = arith.constant 0 : index
    %c0_0 = arith.constant 0 : index
    %c0_1 = arith.constant 0 : index
    %0 = vector.load %arg0[%c0, %c0_0, %c0_1] : memref<16x8x1xf32, #tpu.memory_space<vmem>>, vector<16x8x1xf32>
    %c0_2 = arith.constant 0 : index
    %c0_3 = arith.constant 0 : index
    %c0_4 = arith.constant 0 : index
    %1 = vector.load %arg1[%c0_2, %c0_3, %c0_4] : memref<1x1x32xf32, #tpu.memory_space<vmem>>, vector<1x1x32xf32>
    %2 = vector.broadcast %0 : vector<16x8x1xf32> to vector<16x8x32xf32>
    %3 = vector.broadcast %1 : vector<1x1x32xf32> to vector<16x8x32xf32>
    %4 = arith.mulf %2, %3 : vector<16x8x32xf32>
    %c0_5 = arith.constant 0 : index
    %c0_6 = arith.constant 0 : index
    %c0_7 = arith.constant 0 : index
    %5 = vector.load %arg3[%c0_5, %c0_6, %c0_7] : memref<1x1x32xf32, #tpu.memory_space<vmem>>, vector<1x1x32xf32>
    %6 = vector.broadcast %5 : vector<1x1x32xf32> to vector<16x8x32xf32>
    %7 = arith.addf %4, %6 : vector<16x8x32xf32>
    %c0_8 = arith.constant 0 : index
    %c0_9 = arith.constant 0 : index
    %c0_10 = arith.constant 0 : index
    %8 = vector.load %arg7[%c0_8, %c0_9, %c0_10] : memref<16x8x32xf32, #tpu.memory_space<vmem>>, vector<16x8x32xf32>
    tpu.vector_store %arg7[%c0_8, %c0_9, %c0_10], %7 {strides = array<i32>} : memref<16x8x32xf32, #tpu.memory_space<vmem>>, vector<16x8x32xf32>,
    %c0_11 = arith.constant 0 : index
    %c0_12 = arith.constant 0 : index
    %9 = vector.load %arg2[%c0_11, %c0_12] : memref<32x32xf32, #tpu.memory_space<vmem>>, vector<32x32xf32>
    %cst = arith.constant 0.000000e+00 : f32
    %10 = vector.broadcast %cst : f32 to vector<8x32xf32>
    %c0_i32 = arith.constant 0 : i32
    %11 = arith.index_cast %c0_i32 : i32 to index
    %c0_13 = arith.constant 0 : index
    %c0_14 = arith.constant 0 : index
    %12 = vector.load %arg7[%11, %c0_13, %c0_14] : memref<16x8x32xf32, #tpu.memory_space<vmem>>, vector<1x8x32xf32>
    %13 = vector.shape_cast %12 : vector<1x8x32xf32> to vector<8x32xf32>
    %cst_15 = arith.constant dense<0.000000e+00> : vector<8x32xf32>
    %14 = tpu.matmul %10, %9, %cst_15 {dimension_numbers = #tpu.dot_dimension_numbers<[1], [0], [0], [1], [0, 0, 1, 1], [], []>} : vector<8x32xf32>, vector<32x32xf32>, vector<8x32xf32> -> vector<8x32xf32>
    %15 = arith.addf %13, %14 : vector<8x32xf32>
    %16 = math.tanh %15 : vector<8x32xf32>
    %c1_i32 = arith.constant 1 : i32
    %17 = arith.index_cast %c1_i32 : i32 to index
    %c0_16 = arith.constant 0 : index
    %c0_17 = arith.constant 0 : index
    %18 = vector.load %arg7[%17, %c0_16, %c0_17] : memref<16x8x32xf32, #tpu.memory_space<vmem>>, vector<1x8x32xf32>
    %19 = vector.shape_cast %18 : vector<1x8x32xf32> to vector<8x32xf32>
    %cst_18 = arith.constant dense<0.000000e+00> : vector<8x32xf32>
    %20 = tpu.matmul %16, %9, %cst_18 {dimension_numbers = #tpu.dot_dimension_numbers<[1], [0], [0], [1], [0, 0, 1, 1], [], []>} : vector<8x32xf32>, vector<32x32xf32>, vector<8x32xf32> -> vector<8x32xf32>
    %21 = arith.addf %19, %20 : vector<8x32xf32>
    %22 = math.tanh %21 : vector<8x32xf32>
    %c2_i32 = arith.constant 2 : i32
    %23 = arith.index_cast %c2_i32 : i32 to index
    %c0_19 = arith.constant 0 : index
    %c0_20 = arith.constant 0 : index
    %24 = vector.load %arg7[%23, %c0_19, %c0_20] : memref<16x8x32xf32, #tpu.memory_space<vmem>>, vector<1x8x32xf32>
    %25 = vector.shape_cast %24 : vector<1x8x32xf32> to vector<8x32xf32>
    %cst_21 = arith.constant dense<0.000000e+00> : vector<8x32xf32>
    %26 = tpu.matmul %22, %9, %cst_21 {dimension_numbers = #tpu.dot_dimension_numbers<[1], [0], [0], [1], [0, 0, 1, 1], [], []>} : vector<8x32xf32>, vector<32x32xf32>, vector<8x32xf32> -> vector<8x32xf32>
    %27 = arith.addf %25, %26 : vector<8x32xf32>
    %28 = math.tanh %27 : vector<8x32xf32>
    %c3_i32 = arith.constant 3 : i32
    %29 = arith.index_cast %c3_i32 : i32 to index
    %c0_22 = arith.constant 0 : index
    %c0_23 = arith.constant 0 : index
    %30 = vector.load %arg7[%29, %c0_22, %c0_23] : memref<16x8x32xf32, #tpu.memory_space<vmem>>, vector<1x8x32xf32>
    %31 = vector.shape_cast %30 : vector<1x8x32xf32> to vector<8x32xf32>
    %cst_24 = arith.constant dense<0.000000e+00> : vector<8x32xf32>
    %32 = tpu.matmul %28, %9, %cst_24 {dimension_numbers = #tpu.dot_dimension_numbers<[1], [0], [0], [1], [0, 0, 1, 1], [], []>} : vector<8x32xf32>, vector<32x32xf32>, vector<8x32xf32> -> vector<8x32xf32>
    %33 = arith.addf %31, %32 : vector<8x32xf32>
    %34 = math.tanh %33 : vector<8x32xf32>
    %c4_i32 = arith.constant 4 : i32
    %35 = arith.index_cast %c4_i32 : i32 to index
    %c0_25 = arith.constant 0 : index
    %c0_26 = arith.constant 0 : index
    %36 = vector.load %arg7[%35, %c0_25, %c0_26] : memref<16x8x32xf32, #tpu.memory_space<vmem>>, vector<1x8x32xf32>
    %37 = vector.shape_cast %36 : vector<1x8x32xf32> to vector<8x32xf32>
    %cst_27 = arith.constant dense<0.000000e+00> : vector<8x32xf32>
    %38 = tpu.matmul %34, %9, %cst_27 {dimension_numbers = #tpu.dot_dimension_numbers<[1], [0], [0], [1], [0, 0, 1, 1], [], []>} : vector<8x32xf32>, vector<32x32xf32>, vector<8x32xf32> -> vector<8x32xf32>
    %39 = arith.addf %37, %38 : vector<8x32xf32>
    %40 = math.tanh %39 : vector<8x32xf32>
    %c5_i32 = arith.constant 5 : i32
    %41 = arith.index_cast %c5_i32 : i32 to index
    %c0_28 = arith.constant 0 : index
    %c0_29 = arith.constant 0 : index
    %42 = vector.load %arg7[%41, %c0_28, %c0_29] : memref<16x8x32xf32, #tpu.memory_space<vmem>>, vector<1x8x32xf32>
    %43 = vector.shape_cast %42 : vector<1x8x32xf32> to vector<8x32xf32>
    %cst_30 = arith.constant dense<0.000000e+00> : vector<8x32xf32>
    %44 = tpu.matmul %40, %9, %cst_30 {dimension_numbers = #tpu.dot_dimension_numbers<[1], [0], [0], [1], [0, 0, 1, 1], [], []>} : vector<8x32xf32>, vector<32x32xf32>, vector<8x32xf32> -> vector<8x32xf32>
    %45 = arith.addf %43, %44 : vector<8x32xf32>
    %46 = math.tanh %45 : vector<8x32xf32>
    %c6_i32 = arith.constant 6 : i32
    %47 = arith.index_cast %c6_i32 : i32 to index
    %c0_31 = arith.constant 0 : index
    %c0_32 = arith.constant 0 : index
    %48 = vector.load %arg7[%47, %c0_31, %c0_32] : memref<16x8x32xf32, #tpu.memory_space<vmem>>, vector<1x8x32xf32>
    %49 = vector.shape_cast %48 : vector<1x8x32xf32> to vector<8x32xf32>
    %cst_33 = arith.constant dense<0.000000e+00> : vector<8x32xf32>
    %50 = tpu.matmul %46, %9, %cst_33 {dimension_numbers = #tpu.dot_dimension_numbers<[1], [0], [0], [1], [0, 0, 1, 1], [], []>} : vector<8x32xf32>, vector<32x32xf32>, vector<8x32xf32> -> vector<8x32xf32>
    %51 = arith.addf %49, %50 : vector<8x32xf32>
    %52 = math.tanh %51 : vector<8x32xf32>
    %c7_i32 = arith.constant 7 : i32
    %53 = arith.index_cast %c7_i32 : i32 to index
    %c0_34 = arith.constant 0 : index
    %c0_35 = arith.constant 0 : index
    %54 = vector.load %arg7[%53, %c0_34, %c0_35] : memref<16x8x32xf32, #tpu.memory_space<vmem>>, vector<1x8x32xf32>
    %55 = vector.shape_cast %54 : vector<1x8x32xf32> to vector<8x32xf32>
    %cst_36 = arith.constant dense<0.000000e+00> : vector<8x32xf32>
    %56 = tpu.matmul %52, %9, %cst_36 {dimension_numbers = #tpu.dot_dimension_numbers<[1], [0], [0], [1], [0, 0, 1, 1], [], []>} : vector<8x32xf32>, vector<32x32xf32>, vector<8x32xf32> -> vector<8x32xf32>
    %57 = arith.addf %55, %56 : vector<8x32xf32>
    %58 = math.tanh %57 : vector<8x32xf32>
    %c8_i32 = arith.constant 8 : i32
    %59 = arith.index_cast %c8_i32 : i32 to index
    %c0_37 = arith.constant 0 : index
    %c0_38 = arith.constant 0 : index
    %60 = vector.load %arg7[%59, %c0_37, %c0_38] : memref<16x8x32xf32, #tpu.memory_space<vmem>>, vector<1x8x32xf32>
    %61 = vector.shape_cast %60 : vector<1x8x32xf32> to vector<8x32xf32>
    %cst_39 = arith.constant dense<0.000000e+00> : vector<8x32xf32>
    %62 = tpu.matmul %58, %9, %cst_39 {dimension_numbers = #tpu.dot_dimension_numbers<[1], [0], [0], [1], [0, 0, 1, 1], [], []>} : vector<8x32xf32>, vector<32x32xf32>, vector<8x32xf32> -> vector<8x32xf32>
    %63 = arith.addf %61, %62 : vector<8x32xf32>
    %64 = math.tanh %63 : vector<8x32xf32>
    %c9_i32 = arith.constant 9 : i32
    %65 = arith.index_cast %c9_i32 : i32 to index
    %c0_40 = arith.constant 0 : index
    %c0_41 = arith.constant 0 : index
    %66 = vector.load %arg7[%65, %c0_40, %c0_41] : memref<16x8x32xf32, #tpu.memory_space<vmem>>, vector<1x8x32xf32>
    %67 = vector.shape_cast %66 : vector<1x8x32xf32> to vector<8x32xf32>
    %cst_42 = arith.constant dense<0.000000e+00> : vector<8x32xf32>
    %68 = tpu.matmul %64, %9, %cst_42 {dimension_numbers = #tpu.dot_dimension_numbers<[1], [0], [0], [1], [0, 0, 1, 1], [], []>} : vector<8x32xf32>, vector<32x32xf32>, vector<8x32xf32> -> vector<8x32xf32>
    %69 = arith.addf %67, %68 : vector<8x32xf32>
    %70 = math.tanh %69 : vector<8x32xf32>
    %c10_i32 = arith.constant 10 : i32
    %71 = arith.index_cast %c10_i32 : i32 to index
    %c0_43 = arith.constant 0 : index
    %c0_44 = arith.constant 0 : index
    %72 = vector.load %arg7[%71, %c0_43, %c0_44] : memref<16x8x32xf32, #tpu.memory_space<vmem>>, vector<1x8x32xf32>
    %73 = vector.shape_cast %72 : vector<1x8x32xf32> to vector<8x32xf32>
    %cst_45 = arith.constant dense<0.000000e+00> : vector<8x32xf32>
    %74 = tpu.matmul %70, %9, %cst_45 {dimension_numbers = #tpu.dot_dimension_numbers<[1], [0], [0], [1], [0, 0, 1, 1], [], []>} : vector<8x32xf32>, vector<32x32xf32>, vector<8x32xf32> -> vector<8x32xf32>
    %75 = arith.addf %73, %74 : vector<8x32xf32>
    %76 = math.tanh %75 : vector<8x32xf32>
    %c11_i32 = arith.constant 11 : i32
    %77 = arith.index_cast %c11_i32 : i32 to index
    %c0_46 = arith.constant 0 : index
    %c0_47 = arith.constant 0 : index
    %78 = vector.load %arg7[%77, %c0_46, %c0_47] : memref<16x8x32xf32, #tpu.memory_space<vmem>>, vector<1x8x32xf32>
    %79 = vector.shape_cast %78 : vector<1x8x32xf32> to vector<8x32xf32>
    %cst_48 = arith.constant dense<0.000000e+00> : vector<8x32xf32>
    %80 = tpu.matmul %76, %9, %cst_48 {dimension_numbers = #tpu.dot_dimension_numbers<[1], [0], [0], [1], [0, 0, 1, 1], [], []>} : vector<8x32xf32>, vector<32x32xf32>, vector<8x32xf32> -> vector<8x32xf32>
    %81 = arith.addf %79, %80 : vector<8x32xf32>
    %82 = math.tanh %81 : vector<8x32xf32>
    %c12_i32 = arith.constant 12 : i32
    %83 = arith.index_cast %c12_i32 : i32 to index
    %c0_49 = arith.constant 0 : index
    %c0_50 = arith.constant 0 : index
    %84 = vector.load %arg7[%83, %c0_49, %c0_50] : memref<16x8x32xf32, #tpu.memory_space<vmem>>, vector<1x8x32xf32>
    %85 = vector.shape_cast %84 : vector<1x8x32xf32> to vector<8x32xf32>
    %cst_51 = arith.constant dense<0.000000e+00> : vector<8x32xf32>
    %86 = tpu.matmul %82, %9, %cst_51 {dimension_numbers = #tpu.dot_dimension_numbers<[1], [0], [0], [1], [0, 0, 1, 1], [], []>} : vector<8x32xf32>, vector<32x32xf32>, vector<8x32xf32> -> vector<8x32xf32>
    %87 = arith.addf %85, %86 : vector<8x32xf32>
    %88 = math.tanh %87 : vector<8x32xf32>
    %c13_i32 = arith.constant 13 : i32
    %89 = arith.index_cast %c13_i32 : i32 to index
    %c0_52 = arith.constant 0 : index
    %c0_53 = arith.constant 0 : index
    %90 = vector.load %arg7[%89, %c0_52, %c0_53] : memref<16x8x32xf32, #tpu.memory_space<vmem>>, vector<1x8x32xf32>
    %91 = vector.shape_cast %90 : vector<1x8x32xf32> to vector<8x32xf32>
    %cst_54 = arith.constant dense<0.000000e+00> : vector<8x32xf32>
    %92 = tpu.matmul %88, %9, %cst_54 {dimension_numbers = #tpu.dot_dimension_numbers<[1], [0], [0], [1], [0, 0, 1, 1], [], []>} : vector<8x32xf32>, vector<32x32xf32>, vector<8x32xf32> -> vector<8x32xf32>
    %93 = arith.addf %91, %92 : vector<8x32xf32>
    %94 = math.tanh %93 : vector<8x32xf32>
    %c14_i32 = arith.constant 14 : i32
    %95 = arith.index_cast %c14_i32 : i32 to index
    %c0_55 = arith.constant 0 : index
    %c0_56 = arith.constant 0 : index
    %96 = vector.load %arg7[%95, %c0_55, %c0_56] : memref<16x8x32xf32, #tpu.memory_space<vmem>>, vector<1x8x32xf32>
    %97 = vector.shape_cast %96 : vector<1x8x32xf32> to vector<8x32xf32>
    %cst_57 = arith.constant dense<0.000000e+00> : vector<8x32xf32>
    %98 = tpu.matmul %94, %9, %cst_57 {dimension_numbers = #tpu.dot_dimension_numbers<[1], [0], [0], [1], [0, 0, 1, 1], [], []>} : vector<8x32xf32>, vector<32x32xf32>, vector<8x32xf32> -> vector<8x32xf32>
    %99 = arith.addf %97, %98 : vector<8x32xf32>
    %100 = math.tanh %99 : vector<8x32xf32>
    %c15_i32 = arith.constant 15 : i32
    %101 = arith.index_cast %c15_i32 : i32 to index
    %c0_58 = arith.constant 0 : index
    %c0_59 = arith.constant 0 : index
    %102 = vector.load %arg7[%101, %c0_58, %c0_59] : memref<16x8x32xf32, #tpu.memory_space<vmem>>, vector<1x8x32xf32>
    %103 = vector.shape_cast %102 : vector<1x8x32xf32> to vector<8x32xf32>
    %cst_60 = arith.constant dense<0.000000e+00> : vector<8x32xf32>
    %104 = tpu.matmul %100, %9, %cst_60 {dimension_numbers = #tpu.dot_dimension_numbers<[1], [0], [0], [1], [0, 0, 1, 1], [], []>} : vector<8x32xf32>, vector<32x32xf32>, vector<8x32xf32> -> vector<8x32xf32>
    %105 = arith.addf %103, %104 : vector<8x32xf32>
    %106 = math.tanh %105 : vector<8x32xf32>
    %c16_i32 = arith.constant 16 : i32
    %c0_61 = arith.constant 0 : index
    %c0_62 = arith.constant 0 : index
    %107 = vector.load %arg4[%c0_61, %c0_62] : memref<32x128xf32, #tpu.memory_space<vmem>>, vector<32x128xf32>
    %cst_63 = arith.constant dense<0.000000e+00> : vector<8x128xf32>
    %108 = tpu.matmul %106, %107, %cst_63 {dimension_numbers = #tpu.dot_dimension_numbers<[1], [0], [0], [1], [0, 0, 1, 1], [], []>} : vector<8x32xf32>, vector<32x128xf32>, vector<8x128xf32> -> vector<8x128xf32>
    %c0_64 = arith.constant 0 : index
    %c0_65 = arith.constant 0 : index
    %109 = vector.load %arg5[%c0_64, %c0_65] : memref<1x128xf32, #tpu.memory_space<vmem>>, vector<1x128xf32>
    %110 = vector.broadcast %109 : vector<1x128xf32> to vector<8x128xf32>
    %111 = arith.addf %108, %110 : vector<8x128xf32>
    %c0_66 = arith.constant 0 : index
    %c0_67 = arith.constant 0 : index
    %112 = vector.load %arg6[%c0_66, %c0_67] : memref<8x128xf32, #tpu.memory_space<vmem>>, vector<8x128xf32>
    tpu.vector_store %arg6[%c0_66, %c0_67], %111 {strides = array<i32>} : memref<8x128xf32, #tpu.memory_space<vmem>>, vector<8x128xf32>,
    return
  }
}

</mosaic_0001>

<llo_original>
// kernel: tpu_custom_call.1
$region0: #{tpu_custom_call.1}
  #allocation0 [shape = 'u32[]', space=smem, size = 0x4, offset = 0x4, fixed_abs, tag = 'smem constant byte address 0x4 - core index']
  #allocation1 [shape = 'u32[144,128]{1,0:T(1,128)}', space=vmem, size = 0x12000, scoped, tag = 'internal scratch']
  #allocation2 [shape = 'f32[16,8,32]{2,1,0:T(8,128)}', space=vmem, size = 0x10000, scoped, tag = 'scratch operand']
  %s0 = inlined_call_operand.vmem [shape: f32[16,8,1], index: 0, kind: input, shape index: {}]
  %s1 = inlined_call_operand.vmem [shape: f32[1,1,32], index: 1, kind: input, shape index: {}]
  %s2 = inlined_call_operand.vmem [shape: f32[32,32], index: 2, kind: input, shape index: {}]
  %s3 = inlined_call_operand.vmem [shape: f32[1,1,32], index: 3, kind: input, shape index: {}]
  %s4 = inlined_call_operand.vmem [shape: f32[32,128], index: 4, kind: input, shape index: {}]
  %s5 = inlined_call_operand.vmem [shape: f32[1,128], index: 5, kind: input, shape index: {}]
  %s6 = inlined_call_operand.hbm [shape: f32[8,128], index: 6, kind: output, shape index: {}]
  %s7 = sld [smem:[#allocation0]]
  $region34: #{tpu_custom_call.1} parent=0
    _
  %s9 = ssub.s32 1, %s7
  %s10 = scalar_select 0, %s9, %s7
  $region1: #{tpu_custom_call.1} parent=0
    #allocation3 [shape = 'u8[4096]{0}', space=vmem, size = 0x1000, scoped, tag = 'output window, operand 0, single buffered']
    #allocation4 [shape = 's32[1]{0}', space=sflag, size = 0x4, scoped, tag = 'scoped memory for tpu_custom_call.1']
    %11 = vsyncpa [#allocation4], 0
    // Predicated region
    $region2: #{tpu_custom_call.1} parent=1 // pred_check
      _
    $region3: #{tpu_custom_call.1} parent=1 // pred_check_branch
      %13 = sbr.rel (0) target = $region5
    $region4: #{tpu_custom_call.1} parent=1 // pred_region
      _
    $region5: #{tpu_custom_call.1} parent=1 // pred_fallthru
      _
    // Predicated region
    $region6: #{tpu_custom_call.1} parent=1 // pred_check
      _
    $region7: #{tpu_custom_call.1} parent=1 // pred_check_branch
      %15 = sbr.rel (0) target = $region9
    $region8: #{tpu_custom_call.1} parent=1 // pred_region
      _
    $region9: #{tpu_custom_call.1} parent=1 // pred_fallthru
      _
    // Predicated region
    $region10: #{tpu_custom_call.1} parent=1 // pred_check
      _
    $region11: #{tpu_custom_call.1} parent=1 // pred_check_branch
      %17 = sbr.rel (0) target = $region13
    $region12: #{tpu_custom_call.1} parent=1 // pred_region
      _
    $region13: #{tpu_custom_call.1} parent=1 // pred_fallthru
      _
    // Predicated region
    $region14: #{tpu_custom_call.1} parent=1 // pred_check
      _
    $region15: #{tpu_custom_call.1} parent=1 // pred_check_branch
      %19 = sbr.rel (0) target = $region17
    $region16: #{tpu_custom_call.1} parent=1 // pred_region
      _
    $region17: #{tpu_custom_call.1} parent=1 // pred_fallthru
      _
    // Predicated region
    $region18: #{tpu_custom_call.1} parent=1 // pred_check
      _
    $region19: #{tpu_custom_call.1} parent=1 // pred_check_branch
      %21 = sbr.rel (0) target = $region21
    $region20: #{tpu_custom_call.1} parent=1 // pred_region
      _
    $region21: #{tpu_custom_call.1} parent=1 // pred_fallthru
      _
    // Predicated region
    $region22: #{tpu_custom_call.1} parent=1 // pred_check
      _
    $region23: #{tpu_custom_call.1} parent=1 // pred_check_branch
      %23 = sbr.rel (0) target = $region25
    $region24: #{tpu_custom_call.1} parent=1 // pred_region
      _
    $region25: #{tpu_custom_call.1} parent=1 // pred_fallthru
      _
    %v24 = vld [vmem:[%s0] sm:$0xff]
    %v25 = vld [vmem:[%s0 + $0x8] sm:$0xff]
    %v26 = vld [vmem:[%s0 + $0x10] sm:$0xff]
    %v27 = vld [vmem:[%s0 + $0x18] sm:$0xff]
    %v28 = vld [vmem:[%s0 + $0x20] sm:$0xff]
    %v29 = vld [vmem:[%s0 + $0x28] sm:$0xff]
    %v30 = vld [vmem:[%s0 + $0x30] sm:$0xff]
    %v31 = vld [vmem:[%s0 + $0x38] sm:$0xff]
    %v32 = vld [vmem:[%s0 + $0x40] sm:$0xff]
    %v33 = vld [vmem:[%s0 + $0x48] sm:$0xff]
    %v34 = vld [vmem:[%s0 + $0x50] sm:$0xff]
    %v35 = vld [vmem:[%s0 + $0x58] sm:$0xff]
    %v36 = vld [vmem:[%s0 + $0x60] sm:$0xff]
    %v37 = vld [vmem:[%s0 + $0x68] sm:$0xff]
    %v38 = vld [vmem:[%s0 + $0x70] sm:$0xff]
    %v39 = vld [vmem:[%s0 + $0x78] sm:$0xff]
    %v40 = vld [vmem:[%s1] sm:$0x1]
    %42 = vset.pattern.permute.xlu0 0
    %43 = vperm.xlu0 %42, %v24
    %v44 = vpop.permute.xlu0 %43
    %47 = vset.pattern.permute.xlu0 0
    %48 = vperm.xlu0 %47, %v25
    %v49 = vpop.permute.xlu0 %48
    %52 = vset.pattern.permute.xlu0 0
    %53 = vperm.xlu0 %52, %v26
    %v54 = vpop.permute.xlu0 %53
    %57 = vset.pattern.permute.xlu0 0
    %58 = vperm.xlu0 %57, %v27
    %v59 = vpop.permute.xlu0 %58
    %62 = vset.pattern.permute.xlu0 0
    %63 = vperm.xlu0 %62, %v28
    %v64 = vpop.permute.xlu0 %63
    %67 = vset.pattern.permute.xlu0 0
    %68 = vperm.xlu0 %67, %v29
    %v69 = vpop.permute.xlu0 %68
    %72 = vset.pattern.permute.xlu0 0
    %73 = vperm.xlu0 %72, %v30
    %v74 = vpop.permute.xlu0 %73
    %77 = vset.pattern.permute.xlu0 0
    %78 = vperm.xlu0 %77, %v31
    %v79 = vpop.permute.xlu0 %78
    %82 = vset.pattern.permute.xlu0 0
    %83 = vperm.xlu0 %82, %v32
    %v84 = vpop.permute.xlu0 %83
    %87 = vset.pattern.permute.xlu0 0
    %88 = vperm.xlu0 %87, %v33
    %v89 = vpop.permute.xlu0 %88
    %92 = vset.pattern.permute.xlu0 0
    %93 = vperm.xlu0 %92, %v34
    %v94 = vpop.permute.xlu0 %93
    %97 = vset.pattern.permute.xlu0 0
    %98 = vperm.xlu0 %97, %v35
    %v99 = vpop.permute.xlu0 %98
    %102 = vset.pattern.permute.xlu0 0
    %103 = vperm.xlu0 %102, %v36
    %v104 = vpop.permute.xlu0 %103
    %107 = vset.pattern.permute.xlu0 0
    %108 = vperm.xlu0 %107, %v37
    %v109 = vpop.permute.xlu0 %108
    %112 = vset.pattern.permute.xlu0 0
    %113 = vperm.xlu0 %112, %v38
    %v114 = vpop.permute.xlu0 %113
    %117 = vset.pattern.permute.xlu0 0
    %118 = vperm.xlu0 %117, %v39
    %v119 = vpop.permute.xlu0 %118
    %v122 = vlaneseq
    %v123 = vshrl.u32 %v122, 7
    %v124 = vsub.s32 0, %v123
    %v125 = vrot.slane %v40, %v124
    %v127 = vmul.f32 %v44, %v125
    %v128 = vmul.f32 %v49, %v125
    %v129 = vmul.f32 %v54, %v125
    %v130 = vmul.f32 %v59, %v125
    %v131 = vmul.f32 %v64, %v125
    %v132 = vmul.f32 %v69, %v125
    %v133 = vmul.f32 %v74, %v125
    %v134 = vmul.f32 %v79, %v125
    %v135 = vmul.f32 %v84, %v125
    %v136 = vmul.f32 %v89, %v125
    %v137 = vmul.f32 %v94, %v125
    %v138 = vmul.f32 %v99, %v125
    %v139 = vmul.f32 %v104, %v125
    %v140 = vmul.f32 %v109, %v125
    %v141 = vmul.f32 %v114, %v125
    %v142 = vmul.f32 %v119, %v125
    %v143 = vld [vmem:[%s3] sm:$0x1]
    %v145 = vlaneseq
    %v146 = vshrl.u32 %v145, 7
    %v147 = vsub.s32 0, %v146
    %v148 = vrot.slane %v143, %v147
    %v150 = vadd.f32 %v127, %v148
    %v151 = vadd.f32 %v128, %v148
    %v152 = vadd.f32 %v129, %v148
    %v153 = vadd.f32 %v130, %v148
    %v154 = vadd.f32 %v131, %v148
    %v155 = vadd.f32 %v132, %v148
    %v156 = vadd.f32 %v133, %v148
    %v157 = vadd.f32 %v134, %v148
    %v158 = vadd.f32 %v135, %v148
    %v159 = vadd.f32 %v136, %v148
    %v160 = vadd.f32 %v137, %v148
    %v161 = vadd.f32 %v138, %v148
    %v162 = vadd.f32 %v139, %v148
    %v163 = vadd.f32 %v140, %v148
    %v164 = vadd.f32 %v141, %v148
    %v165 = vadd.f32 %v142, %v148
    %vm166 = vcmask 261120
    %167 = vst.msk [vmem:[#allocation2] sm:$0xff] %vm166, %v150
    %168 = vst.msk [vmem:[#allocation2 + $0x8] sm:$0xff] %vm166, %v151
    %169 = vst.msk [vmem:[#allocation2 + $0x10] sm:$0xff] %vm166, %v152
    %170 = vst.msk [vmem:[#allocation2 + $0x18] sm:$0xff] %vm166, %v153
    %171 = vst.msk [vmem:[#allocation2 + $0x20] sm:$0xff] %vm166, %v154
    %172 = vst.msk [vmem:[#allocation2 + $0x28] sm:$0xff] %vm166, %v155
    %173 = vst.msk [vmem:[#allocation2 + $0x30] sm:$0xff] %vm166, %v156
    %174 = vst.msk [vmem:[#allocation2 + $0x38] sm:$0xff] %vm166, %v157
    %175 = vst.msk [vmem:[#allocation2 + $0x40] sm:$0xff] %vm166, %v158
    %176 = vst.msk [vmem:[#allocation2 + $0x48] sm:$0xff] %vm166, %v159
    %177 = vst.msk [vmem:[#allocation2 + $0x50] sm:$0xff] %vm166, %v160
    %178 = vst.msk [vmem:[#allocation2 + $0x58] sm:$0xff] %vm166, %v161
    %179 = vst.msk [vmem:[#allocation2 + $0x60] sm:$0xff] %vm166, %v162
    %180 = vst.msk [vmem:[#allocation2 + $0x68] sm:$0xff] %vm166, %v163
    %181 = vst.msk [vmem:[#allocation2 + $0x70] sm:$0xff] %vm166, %v164
    %182 = vst.msk [vmem:[#allocation2 + $0x78] sm:$0xff] %vm166, %v165
    %v183 = vld [vmem:[%s2] sm:$0xff]
    %v184 = vld [vmem:[%s2 + $0x8] sm:$0xff]
    %v185 = vld [vmem:[%s2 + $0x10] sm:$0xff]
    %v186 = vld [vmem:[%s2 + $0x18] sm:$0xff]
    %v187 = vld [vmem:[#allocation2] sm:$0xff]
    %v189 = vsel %vm166, 0.0, 0
    %191 = vmatprep.subr.mxu0 0.0
    %192 = vmatpush1.msra.mxu0 %v183
    %193 = vmatprep.subr.mxu0 0.0
    %194 = vmatpush1.msra.mxu0 %v184
    %195 = vmatprep.subr.mxu0 0.0
    %196 = vmatpush1.msra.mxu0 %v185
    %197 = vmatprep.subr.mxu0 0.0
    %198 = vmatpush1.msra.mxu0 %v186
    %199 = vmatprep.subr.mxu0 0.0
    %200 = vmatpush1.msra.mxu0 0.0
    %201 = vmatprep.subr.mxu0 0.0
    %202 = vmatpush1.msra.mxu0 0.0
    %203 = vmatprep.subr.mxu0 0.0
    %204 = vmatpush1.msra.mxu0 0.0
    %205 = vmatprep.subr.mxu0 0.0
    %206 = vmatpush1.msra.mxu0 0.0
    %207 = vmatprep.subr.mxu0 0.0
    %208 = vmatpush1.msra.mxu0 0.0
    %209 = vmatprep.subr.mxu0 0.0
    %210 = vmatpush1.msra.mxu0 0.0
    %211 = vmatprep.subr.mxu0 0.0
    %212 = vmatpush1.msra.mxu0 0.0
    %213 = vmatprep.subr.mxu0 0.0
    %214 = vmatpush1.msra.mxu0 0.0
    %215 = vmatprep.subr.mxu0 0.0
    %216 = vmatpush1.msra.mxu0 0.0
    %217 = vmatprep.subr.mxu0 0.0
    %218 = vmatpush1.msra.mxu0 0.0
    %219 = vmatprep.subr.mxu0 0.0
    %220 = vmatpush1.msra.mxu0 0.0
    %221 = vmatprep.subr.mxu0 0.0
    %222 = vmatpush1.msra.mxu0 0.0
    %223 = vmatprep.subr.mxu0 0.0
    %224 = vmatpush1.msra.mxu0 0.0
    %225 = vmatprep.subr.mxu0 0.0
    %226 = vmatpush1.msra.mxu0 0.0
    %227 = vmatprep.subr.mxu0 0.0
    %228 = vmatpush1.msra.mxu0 0.0
    %229 = vmatprep.subr.mxu0 0.0
    %230 = vmatpush1.msra.mxu0 0.0
    %231 = vmatprep.subr.mxu0 0.0
    %232 = vmatpush1.msra.mxu0 0.0
    %233 = vmatprep.subr.mxu0 0.0
    %234 = vmatpush1.msra.mxu0 0.0
    %235 = vmatprep.subr.mxu0 0.0
    %236 = vmatpush1.msra.mxu0 0.0
    %237 = vmatprep.subr.mxu0 0.0
    %238 = vmatpush1.msra.mxu0 0.0
    %239 = vmatprep.subr.mxu0 0.0
    %240 = vmatpush1.msra.mxu0 0.0
    %241 = vmatprep.subr.mxu0 0.0
    %242 = vmatpush1.msra.mxu0 0.0
    %243 = vmatprep.subr.mxu0 0.0
    %244 = vmatpush1.msra.mxu0 0.0
    %245 = vmatprep.subr.mxu0 0.0
    %246 = vmatpush1.msra.mxu0 0.0
    %247 = vmatprep.subr.mxu0 0.0
    %248 = vmatpush1.msra.mxu0 0.0
    %249 = vmatprep.subr.mxu0 0.0
    %250 = vmatpush1.msra.mxu0 0.0
    %251 = vmatprep.subr.mxu0 0.0
    %252 = vmatpush1.msra.mxu0 0.0
    %253 = vmatprep.subr.mxu0 0.0
    %254 = vmatpush1.msra.mxu0 0.0
    %255 = vmatprep.mubr.f32.mxu0 0.0
    %256 = vmatmul.mubr.f32.gmra.mrb[0].mxu0 %v189
    %v257 = vpop.f32.mrb[0].mxu0
    %v258 = vadd.f32 0.0, %v257
    %v259 = vpop.f32.mrb[0].mxu0
    %260 = vdwg.mxu0
    %v261 = vadd.f32 %v187, %v258
    %v262 = vtanh.pop %v261
    %s263 = scalar_lea.vmem [#allocation2], 8
    %v264 = vld [vmem:[%s263] sm:$0xff]
    %v266 = vsel %vm166, %v262, 0
    %268 = vmatprep.subr.mxu0 0.0
    %269 = vmatpush1.msra.mxu0 %v183
    %270 = vmatprep.subr.mxu0 0.0
    %271 = vmatpush1.msra.mxu0 %v184
    %272 = vmatprep.subr.mxu0 0.0
    %273 = vmatpush1.msra.mxu0 %v185
    %274 = vmatprep.subr.mxu0 0.0
    %275 = vmatpush1.msra.mxu0 %v186
    %276 = vmatprep.subr.mxu0 0.0
    %277 = vmatpush1.msra.mxu0 0.0
    %278 = vmatprep.subr.mxu0 0.0
    %279 = vmatpush1.msra.mxu0 0.0
    %280 = vmatprep.subr.mxu0 0.0
    %281 = vmatpush1.msra.mxu0 0.0
    %282 = vmatprep.subr.mxu0 0.0
    %283 = vmatpush1.msra.mxu0 0.0
    %284 = vmatprep.subr.mxu0 0.0
    %285 = vmatpush1.msra.mxu0 0.0
    %286 = vmatprep.subr.mxu0 0.0
    %287 = vmatpush1.msra.mxu0 0.0
    %288 = vmatprep.subr.mxu0 0.0
    %289 = vmatpush1.msra.mxu0 0.0
    %290 = vmatprep.subr.mxu0 0.0
    %291 = vmatpush1.msra.mxu0 0.0
    %292 = vmatprep.subr.mxu0 0.0
    %293 = vmatpush1.msra.mxu0 0.0
    %294 = vmatprep.subr.mxu0 0.0
    %295 = vmatpush1.msra.mxu0 0.0
    %296 = vmatprep.subr.mxu0 0.0
    %297 = vmatpush1.msra.mxu0 0.0
    %298 = vmatprep.subr.mxu0 0.0
    %299 = vmatpush1.msra.mxu0 0.0
    %300 = vmatprep.subr.mxu0 0.0
    %301 = vmatpush1.msra.mxu0 0.0
    %302 = vmatprep.subr.mxu0 0.0
    %303 = vmatpush1.msra.mxu0 0.0
    %304 = vmatprep.subr.mxu0 0.0
    %305 = vmatpush1.msra.mxu0 0.0
    %306 = vmatprep.subr.mxu0 0.0
    %307 = vmatpush1.msra.mxu0 0.0
    %308 = vmatprep.subr.mxu0 0.0
    %309 = vmatpush1.msra.mxu0 0.0
    %310 = vmatprep.subr.mxu0 0.0
    %311 = vmatpush1.msra.mxu0 0.0
    %312 = vmatprep.subr.mxu0 0.0
    %313 = vmatpush1.msra.mxu0 0.0
    %314 = vmatprep.subr.mxu0 0.0
    %315 = vmatpush1.msra.mxu0 0.0
    %316 = vmatprep.subr.mxu0 0.0
    %317 = vmatpush1.msra.mxu0 0.0
    %318 = vmatprep.subr.mxu0 0.0
    %319 = vmatpush1.msra.mxu0 0.0
    %320 = vmatprep.subr.mxu0 0.0
    %321 = vmatpush1.msra.mxu0 0.0
    %322 = vmatprep.subr.mxu0 0.0
    %323 = vmatpush1.msra.mxu0 0.0
    %324 = vmatprep.subr.mxu0 0.0
    %325 = vmatpush1.msra.mxu0 0.0
    %326 = vmatprep.subr.mxu0 0.0
    %327 = vmatpush1.msra.mxu0 0.0
    %328 = vmatprep.subr.mxu0 0.0
    %329 = vmatpush1.msra.mxu0 0.0
    %330 = vmatprep.subr.mxu0 0.0
    %331 = vmatpush1.msra.mxu0 0.0
    %332 = vmatprep.mubr.f32.mxu0 0.0
    %333 = vmatmul.mubr.f32.gmra.mrb[0].mxu0 %v266
    %v334 = vpop.f32.mrb[0].mxu0
    %v335 = vadd.f32 0.0, %v334
    %v336 = vpop.f32.mrb[0].mxu0
    %337 = vdwg.mxu0
    %v338 = vadd.f32 %v264, %v335
    %v339 = vtanh.pop %v338
    %s340 = scalar_lea.vmem [#allocation2], 16
    %v341 = vld [vmem:[%s340] sm:$0xff]
    %v343 = vsel %vm166, %v339, 0
    %345 = vmatprep.subr.mxu0 0.0
    %346 = vmatpush1.msra.mxu0 %v183
    %347 = vmatprep.subr.mxu0 0.0
    %348 = vmatpush1.msra.mxu0 %v184
    %349 = vmatprep.subr.mxu0 0.0
    %350 = vmatpush1.msra.mxu0 %v185
    %351 = vmatprep.subr.mxu0 0.0
    %352 = vmatpush1.msra.mxu0 %v186
    %353 = vmatprep.subr.mxu0 0.0
    %354 = vmatpush1.msra.mxu0 0.0
    %355 = vmatprep.subr.mxu0 0.0
    %356 = vmatpush1.msra.mxu0 0.0
    %357 = vmatprep.subr.mxu0 0.0
    %358 = vmatpush1.msra.mxu0 0.0
    %359 = vmatprep.subr.mxu0 0.0
    %360 = vmatpush1.msra.mxu0 0.0
    %361 = vmatprep.subr.mxu0 0.0
    %362 = vmatpush1.msra.mxu0 0.0
    %363 = vmatprep.subr.mxu0 0.0
    %364 = vmatpush1.msra.mxu0 0.0
    %365 = vmatprep.subr.mxu0 0.0
    %366 = vmatpush1.msra.mxu0 0.0
    %367 = vmatprep.subr.mxu0 0.0
    %368 = vmatpush1.msra.mxu0 0.0
    %369 = vmatprep.subr.mxu0 0.0
    %370 = vmatpush1.msra.mxu0 0.0
    %371 = vmatprep.subr.mxu0 0.0
    %372 = vmatpush1.msra.mxu0 0.0
    %373 = vmatprep.subr.mxu0 0.0
    %374 = vmatpush1.msra.mxu0 0.0
    %375 = vmatprep.subr.mxu0 0.0
    %376 = vmatpush1.msra.mxu0 0.0
    %377 = vmatprep.subr.mxu0 0.0
    %378 = vmatpush1.msra.mxu0 0.0
    %379 = vmatprep.subr.mxu0 0.0
    %380 = vmatpush1.msra.mxu0 0.0
    %381 = vmatprep.subr.mxu0 0.0
    %382 = vmatpush1.msra.mxu0 0.0
    %383 = vmatprep.subr.mxu0 0.0
    %384 = vmatpush1.msra.mxu0 0.0
    %385 = vmatprep.subr.mxu0 0.0
    %386 = vmatpush1.msra.mxu0 0.0
    %387 = vmatprep.subr.mxu0 0.0
    %388 = vmatpush1.msra.mxu0 0.0
    %389 = vmatprep.subr.mxu0 0.0
    %390 = vmatpush1.msra.mxu0 0.0
    %391 = vmatprep.subr.mxu0 0.0
    %392 = vmatpush1.msra.mxu0 0.0
    %393 = vmatprep.subr.mxu0 0.0
    %394 = vmatpush1.msra.mxu0 0.0
    %395 = vmatprep.subr.mxu0 0.0
    %396 = vmatpush1.msra.mxu0 0.0
    %397 = vmatprep.subr.mxu0 0.0
    %398 = vmatpush1.msra.mxu0 0.0
    %399 = vmatprep.subr.mxu0 0.0
    %400 = vmatpush1.msra.mxu0 0.0
    %401 = vmatprep.subr.mxu0 0.0
    %402 = vmatpush1.msra.mxu0 0.0
    %403 = vmatprep.subr.mxu0 0.0
    %404 = vmatpush1.msra.mxu0 0.0
    %405 = vmatprep.subr.mxu0 0.0
    %406 = vmatpush1.msra.mxu0 0.0
    %407 = vmatprep.subr.mxu0 0.0
    %408 = vmatpush1.msra.mxu0 0.0
    %409 = vmatprep.mubr.f32.mxu0 0.0
    %410 = vmatmul.mubr.f32.gmra.mrb[0].mxu0 %v343
    %v411 = vpop.f32.mrb[0].mxu0
    %v412 = vadd.f32 0.0, %v411
    %v413 = vpop.f32.mrb[0].mxu0
    %414 = vdwg.mxu0
    %v415 = vadd.f32 %v341, %v412
    %v416 = vtanh.pop %v415
    %s417 = scalar_lea.vmem [#allocation2], 24
    %v418 = vld [vmem:[%s417] sm:$0xff]
    %v420 = vsel %vm166, %v416, 0
    %422 = vmatprep.subr.mxu0 0.0
    %423 = vmatpush1.msra.mxu0 %v183
    %424 = vmatprep.subr.mxu0 0.0
    %425 = vmatpush1.msra.mxu0 %v184
    %426 = vmatprep.subr.mxu0 0.0
    %427 = vmatpush1.msra.mxu0 %v185
    %428 = vmatprep.subr.mxu0 0.0
    %429 = vmatpush1.msra.mxu0 %v186
    %430 = vmatprep.subr.mxu0 0.0
    %431 = vmatpush1.msra.mxu0 0.0
    %432 = vmatprep.subr.mxu0 0.0
    %433 = vmatpush1.msra.mxu0 0.0
    %434 = vmatprep.subr.mxu0 0.0
    %435 = vmatpush1.msra.mxu0 0.0
    %436 = vmatprep.subr.mxu0 0.0
    %437 = vmatpush1.msra.mxu0 0.0
    %438 = vmatprep.subr.mxu0 0.0
    %439 = vmatpush1.msra.mxu0 0.0
    %440 = vmatprep.subr.mxu0 0.0
    %441 = vmatpush1.msra.mxu0 0.0
    %442 = vmatprep.subr.mxu0 0.0
    %443 = vmatpush1.msra.mxu0 0.0
    %444 = vmatprep.subr.mxu0 0.0
    %445 = vmatpush1.msra.mxu0 0.0
    %446 = vmatprep.subr.mxu0 0.0
    %447 = vmatpush1.msra.mxu0 0.0
    %448 = vmatprep.subr.mxu0 0.0
    %449 = vmatpush1.msra.mxu0 0.0
    %450 = vmatprep.subr.mxu0 0.0
    %451 = vmatpush1.msra.mxu0 0.0
    %452 = vmatprep.subr.mxu0 0.0
    %453 = vmatpush1.msra.mxu0 0.0
    %454 = vmatprep.subr.mxu0 0.0
    %455 = vmatpush1.msra.mxu0 0.0
    %456 = vmatprep.subr.mxu0 0.0
    %457 = vmatpush1.msra.mxu0 0.0
    %458 = vmatprep.subr.mxu0 0.0
    %459 = vmatpush1.msra.mxu0 0.0
    %460 = vmatprep.subr.mxu0 0.0
    %461 = vmatpush1.msra.mxu0 0.0
    %462 = vmatprep.subr.mxu0 0.0
    %463 = vmatpush1.msra.mxu0 0.0
    %464 = vmatprep.subr.mxu0 0.0
    %465 = vmatpush1.msra.mxu0 0.0
    %466 = vmatprep.subr.mxu0 0.0
    %467 = vmatpush1.msra.mxu0 0.0
    %468 = vmatprep.subr.mxu0 0.0
    %469 = vmatpush1.msra.mxu0 0.0
    %470 = vmatprep.subr.mxu0 0.0
    %471 = vmatpush1.msra.mxu0 0.0
    %472 = vmatprep.subr.mxu0 0.0
    %473 = vmatpush1.msra.mxu0 0.0
    %474 = vmatprep.subr.mxu0 0.0
    %475 = vmatpush1.msra.mxu0 0.0
    %476 = vmatprep.subr.mxu0 0.0
    %477 = vmatpush1.msra.mxu0 0.0
    %478 = vmatprep.subr.mxu0 0.0
    %479 = vmatpush1.msra.mxu0 0.0
    %480 = vmatprep.subr.mxu0 0.0
    %481 = vmatpush1.msra.mxu0 0.0
    %482 = vmatprep.subr.mxu0 0.0
    %483 = vmatpush1.msra.mxu0 0.0
    %484 = vmatprep.subr.mxu0 0.0
    %485 = vmatpush1.msra.mxu0 0.0
    %486 = vmatprep.mubr.f32.mxu0 0.0
    %487 = vmatmul.mubr.f32.gmra.mrb[0].mxu0 %v420
    %v488 = vpop.f32.mrb[0].mxu0
    %v489 = vadd.f32 0.0, %v488
    %v490 = vpop.f32.mrb[0].mxu0
    %491 = vdwg.mxu0
    %v492 = vadd.f32 %v418, %v489
    %v493 = vtanh.pop %v492
    %s494 = scalar_lea.vmem [#allocation2], 32
    %v495 = vld [vmem:[%s494] sm:$0xff]
    %v497 = vsel %vm166, %v493, 0
    %499 = vmatprep.subr.mxu0 0.0
    %500 = vmatpush1.msra.mxu0 %v183
    %501 = vmatprep.subr.mxu0 0.0
    %502 = vmatpush1.msra.mxu0 %v184
    %503 = vmatprep.subr.mxu0 0.0
    %504 = vmatpush1.msra.mxu0 %v185
    %505 = vmatprep.subr.mxu0 0.0
    %506 = vmatpush1.msra.mxu0 %v186
    %507 = vmatprep.subr.mxu0 0.0
    %508 = vmatpush1.msra.mxu0 0.0
    %509 = vmatprep.subr.mxu0 0.0
    %510 = vmatpush1.msra.mxu0 0.0
    %511 = vmatprep.subr.mxu0 0.0
    %512 = vmatpush1.msra.mxu0 0.0
    %513 = vmatprep.subr.mxu0 0.0
    %514 = vmatpush1.msra.mxu0 0.0
    %515 = vmatprep.subr.mxu0 0.0
    %516 = vmatpush1.msra.mxu0 0.0
    %517 = vmatprep.subr.mxu0 0.0
    %518 = vmatpush1.msra.mxu0 0.0
    %519 = vmatprep.subr.mxu0 0.0
    %520 = vmatpush1.msra.mxu0 0.0
    %521 = vmatprep.subr.mxu0 0.0
    %522 = vmatpush1.msra.mxu0 0.0
    %523 = vmatprep.subr.mxu0 0.0
    %524 = vmatpush1.msra.mxu0 0.0
    %525 = vmatprep.subr.mxu0 0.0
    %526 = vmatpush1.msra.mxu0 0.0
    %527 = vmatprep.subr.mxu0 0.0
    %528 = vmatpush1.msra.mxu0 0.0
    %529 = vmatprep.subr.mxu0 0.0
    %530 = vmatpush1.msra.mxu0 0.0
    %531 = vmatprep.subr.mxu0 0.0
    %532 = vmatpush1.msra.mxu0 0.0
    %533 = vmatprep.subr.mxu0 0.0
    %534 = vmatpush1.msra.mxu0 0.0
    %535 = vmatprep.subr.mxu0 0.0
    %536 = vmatpush1.msra.mxu0 0.0
    %537 = vmatprep.subr.mxu0 0.0
    %538 = vmatpush1.msra.mxu0 0.0
    %539 = vmatprep.subr.mxu0 0.0
    %540 = vmatpush1.msra.mxu0 0.0
    %541 = vmatprep.subr.mxu0 0.0
    %542 = vmatpush1.msra.mxu0 0.0
    %543 = vmatprep.subr.mxu0 0.0
    %544 = vmatpush1.msra.mxu0 0.0
    %545 = vmatprep.subr.mxu0 0.0
    %546 = vmatpush1.msra.mxu0 0.0
    %547 = vmatprep.subr.mxu0 0.0
    %548 = vmatpush1.msra.mxu0 0.0
    %549 = vmatprep.subr.mxu0 0.0
    %550 = vmatpush1.msra.mxu0 0.0
    %551 = vmatprep.subr.mxu0 0.0
    %552 = vmatpush1.msra.mxu0 0.0
    %553 = vmatprep.subr.mxu0 0.0
    %554 = vmatpush1.msra.mxu0 0.0
    %555 = vmatprep.subr.mxu0 0.0
    %556 = vmatpush1.msra.mxu0 0.0
    %557 = vmatprep.subr.mxu0 0.0
    %558 = vmatpush1.msra.mxu0 0.0
    %559 = vmatprep.subr.mxu0 0.0
    %560 = vmatpush1.msra.mxu0 0.0
    %561 = vmatprep.subr.mxu0 0.0
    %562 = vmatpush1.msra.mxu0 0.0
    %563 = vmatprep.mubr.f32.mxu0 0.0
    %564 = vmatmul.mubr.f32.gmra.mrb[0].mxu0 %v497
    %v565 = vpop.f32.mrb[0].mxu0
    %v566 = vadd.f32 0.0, %v565
    %v567 = vpop.f32.mrb[0].mxu0
    %568 = vdwg.mxu0
    %v569 = vadd.f32 %v495, %v566
    %v570 = vtanh.pop %v569
    %s571 = scalar_lea.vmem [#allocation2], 40
    %v572 = vld [vmem:[%s571] sm:$0xff]
    %v574 = vsel %vm166, %v570, 0
    %576 = vmatprep.subr.mxu0 0.0
    %577 = vmatpush1.msra.mxu0 %v183
    %578 = vmatprep.subr.mxu0 0.0
    %579 = vmatpush1.msra.mxu0 %v184
    %580 = vmatprep.subr.mxu0 0.0
    %581 = vmatpush1.msra.mxu0 %v185
    %582 = vmatprep.subr.mxu0 0.0
    %583 = vmatpush1.msra.mxu0 %v186
    %584 = vmatprep.subr.mxu0 0.0
    %585 = vmatpush1.msra.mxu0 0.0
    %586 = vmatprep.subr.mxu0 0.0
    %587 = vmatpush1.msra.mxu0 0.0
    %588 = vmatprep.subr.mxu0 0.0
    %589 = vmatpush1.msra.mxu0 0.0
    %590 = vmatprep.subr.mxu0 0.0
    %591 = vmatpush1.msra.mxu0 0.0
    %592 = vmatprep.subr.mxu0 0.0
    %593 = vmatpush1.msra.mxu0 0.0
    %594 = vmatprep.subr.mxu0 0.0
    %595 = vmatpush1.msra.mxu0 0.0
    %596 = vmatprep.subr.mxu0 0.0
    %597 = vmatpush1.msra.mxu0 0.0
    %598 = vmatprep.subr.mxu0 0.0
    %599 = vmatpush1.msra.mxu0 0.0
    %600 = vmatprep.subr.mxu0 0.0
    %601 = vmatpush1.msra.mxu0 0.0
    %602 = vmatprep.subr.mxu0 0.0
    %603 = vmatpush1.msra.mxu0 0.0
    %604 = vmatprep.subr.mxu0 0.0
    %605 = vmatpush1.msra.mxu0 0.0
    %606 = vmatprep.subr.mxu0 0.0
    %607 = vmatpush1.msra.mxu0 0.0
    %608 = vmatprep.subr.mxu0 0.0
    %609 = vmatpush1.msra.mxu0 0.0
    %610 = vmatprep.subr.mxu0 0.0
    %611 = vmatpush1.msra.mxu0 0.0
    %612 = vmatprep.subr.mxu0 0.0
    %613 = vmatpush1.msra.mxu0 0.0
    %614 = vmatprep.subr.mxu0 0.0
    %615 = vmatpush1.msra.mxu0 0.0
    %616 = vmatprep.subr.mxu0 0.0
    %617 = vmatpush1.msra.mxu0 0.0
    %618 = vmatprep.subr.mxu0 0.0
    %619 = vmatpush1.msra.mxu0 0.0
    %620 = vmatprep.subr.mxu0 0.0
    %621 = vmatpush1.msra.mxu0 0.0
    %622 = vmatprep.subr.mxu0 0.0
    %623 = vmatpush1.msra.mxu0 0.0
    %624 = vmatprep.subr.mxu0 0.0
    %625 = vmatpush1.msra.mxu0 0.0
    %626 = vmatprep.subr.mxu0 0.0
    %627 = vmatpush1.msra.mxu0 0.0
    %628 = vmatprep.subr.mxu0 0.0
    %629 = vmatpush1.msra.mxu0 0.0
    %630 = vmatprep.subr.mxu0 0.0
    %631 = vmatpush1.msra.mxu0 0.0
    %632 = vmatprep.subr.mxu0 0.0
    %633 = vmatpush1.msra.mxu0 0.0
    %634 = vmatprep.subr.mxu0 0.0
    %635 = vmatpush1.msra.mxu0 0.0
    %636 = vmatprep.subr.mxu0 0.0
    %637 = vmatpush1.msra.mxu0 0.0
    %638 = vmatprep.subr.mxu0 0.0
    %639 = vmatpush1.msra.mxu0 0.0
    %640 = vmatprep.mubr.f32.mxu0 0.0
    %641 = vmatmul.mubr.f32.gmra.mrb[0].mxu0 %v574
    %v642 = vpop.f32.mrb[0].mxu0
    %v643 = vadd.f32 0.0, %v642
    %v644 = vpop.f32.mrb[0].mxu0
    %645 = vdwg.mxu0
    %v646 = vadd.f32 %v572, %v643
    %v647 = vtanh.pop %v646
    %s648 = scalar_lea.vmem [#allocation2], 48
    %v649 = vld [vmem:[%s648] sm:$0xff]
    %v651 = vsel %vm166, %v647, 0
    %653 = vmatprep.subr.mxu0 0.0
    %654 = vmatpush1.msra.mxu0 %v183
    %655 = vmatprep.subr.mxu0 0.0
    %656 = vmatpush1.msra.mxu0 %v184
    %657 = vmatprep.subr.mxu0 0.0
    %658 = vmatpush1.msra.mxu0 %v185
    %659 = vmatprep.subr.mxu0 0.0
    %660 = vmatpush1.msra.mxu0 %v186
    %661 = vmatprep.subr.mxu0 0.0
    %662 = vmatpush1.msra.mxu0 0.0
    %663 = vmatprep.subr.mxu0 0.0
    %664 = vmatpush1.msra.mxu0 0.0
    %665 = vmatprep.subr.mxu0 0.0
    %666 = vmatpush1.msra.mxu0 0.0
    %667 = vmatprep.subr.mxu0 0.0
    %668 = vmatpush1.msra.mxu0 0.0
    %669 = vmatprep.subr.mxu0 0.0
    %670 = vmatpush1.msra.mxu0 0.0
    %671 = vmatprep.subr.mxu0 0.0
    %672 = vmatpush1.msra.mxu0 0.0
    %673 = vmatprep.subr.mxu0 0.0
    %674 = vmatpush1.msra.mxu0 0.0
    %675 = vmatprep.subr.mxu0 0.0
    %676 = vmatpush1.msra.mxu0 0.0
    %677 = vmatprep.subr.mxu0 0.0
    %678 = vmatpush1.msra.mxu0 0.0
    %679 = vmatprep.subr.mxu0 0.0
    %680 = vmatpush1.msra.mxu0 0.0
    %681 = vmatprep.subr.mxu0 0.0
    %682 = vmatpush1.msra.mxu0 0.0
    %683 = vmatprep.subr.mxu0 0.0
    %684 = vmatpush1.msra.mxu0 0.0
    %685 = vmatprep.subr.mxu0 0.0
    %686 = vmatpush1.msra.mxu0 0.0
    %687 = vmatprep.subr.mxu0 0.0
    %688 = vmatpush1.msra.mxu0 0.0
    %689 = vmatprep.subr.mxu0 0.0
    %690 = vmatpush1.msra.mxu0 0.0
    %691 = vmatprep.subr.mxu0 0.0
    %692 = vmatpush1.msra.mxu0 0.0
    %693 = vmatprep.subr.mxu0 0.0
    %694 = vmatpush1.msra.mxu0 0.0
    %695 = vmatprep.subr.mxu0 0.0
    %696 = vmatpush1.msra.mxu0 0.0
    %697 = vmatprep.subr.mxu0 0.0
    %698 = vmatpush1.msra.mxu0 0.0
    %699 = vmatprep.subr.mxu0 0.0
    %700 = vmatpush1.msra.mxu0 0.0
    %701 = vmatprep.subr.mxu0 0.0
    %702 = vmatpush1.msra.mxu0 0.0
    %703 = vmatprep.subr.mxu0 0.0
    %704 = vmatpush1.msra.mxu0 0.0
    %705 = vmatprep.subr.mxu0 0.0
    %706 = vmatpush1.msra.mxu0 0.0
    %707 = vmatprep.subr.mxu0 0.0
    %708 = vmatpush1.msra.mxu0 0.0
    %709 = vmatprep.subr.mxu0 0.0
    %710 = vmatpush1.msra.mxu0 0.0
    %711 = vmatprep.subr.mxu0 0.0
    %712 = vmatpush1.msra.mxu0 0.0
    %713 = vmatprep.subr.mxu0 0.0
    %714 = vmatpush1.msra.mxu0 0.0
    %715 = vmatprep.subr.mxu0 0.0
    %716 = vmatpush1.msra.mxu0 0.0
    %717 = vmatprep.mubr.f32.mxu0 0.0
    %718 = vmatmul.mubr.f32.gmra.mrb[0].mxu0 %v651
    %v719 = vpop.f32.mrb[0].mxu0
    %v720 = vadd.f32 0.0, %v719
    %v721 = vpop.f32.mrb[0].mxu0
    %722 = vdwg.mxu0
    %v723 = vadd.f32 %v649, %v720
    %v724 = vtanh.pop %v723
    %s725 = scalar_lea.vmem [#allocation2], 56
    %v726 = vld [vmem:[%s725] sm:$0xff]
    %v728 = vsel %vm166, %v724, 0
    %730 = vmatprep.subr.mxu0 0.0
    %731 = vmatpush1.msra.mxu0 %v183
    %732 = vmatprep.subr.mxu0 0.0
    %733 = vmatpush1.msra.mxu0 %v184
    %734 = vmatprep.subr.mxu0 0.0
    %735 = vmatpush1.msra.mxu0 %v185
    %736 = vmatprep.subr.mxu0 0.0
    %737 = vmatpush1.msra.mxu0 %v186
    %738 = vmatprep.subr.mxu0 0.0
    %739 = vmatpush1.msra.mxu0 0.0
    %740 = vmatprep.subr.mxu0 0.0
    %741 = vmatpush1.msra.mxu0 0.0
    %742 = vmatprep.subr.mxu0 0.0
    %743 = vmatpush1.msra.mxu0 0.0
    %744 = vmatprep.subr.mxu0 0.0
    %745 = vmatpush1.msra.mxu0 0.0
    %746 = vmatprep.subr.mxu0 0.0
    %747 = vmatpush1.msra.mxu0 0.0
    %748 = vmatprep.subr.mxu0 0.0
    %749 = vmatpush1.msra.mxu0 0.0
    %750 = vmatprep.subr.mxu0 0.0
    %751 = vmatpush1.msra.mxu0 0.0
    %752 = vmatprep.subr.mxu0 0.0
    %753 = vmatpush1.msra.mxu0 0.0
    %754 = vmatprep.subr.mxu0 0.0
    %755 = vmatpush1.msra.mxu0 0.0
    %756 = vmatprep.subr.mxu0 0.0
    %757 = vmatpush1.msra.mxu0 0.0
    %758 = vmatprep.subr.mxu0 0.0
    %759 = vmatpush1.msra.mxu0 0.0
    %760 = vmatprep.subr.mxu0 0.0
    %761 = vmatpush1.msra.mxu0 0.0
    %762 = vmatprep.subr.mxu0 0.0
    %763 = vmatpush1.msra.mxu0 0.0
    %764 = vmatprep.subr.mxu0 0.0
    %765 = vmatpush1.msra.mxu0 0.0
    %766 = vmatprep.subr.mxu0 0.0
    %767 = vmatpush1.msra.mxu0 0.0
    %768 = vmatprep.subr.mxu0 0.0
    %769 = vmatpush1.msra.mxu0 0.0
    %770 = vmatprep.subr.mxu0 0.0
    %771 = vmatpush1.msra.mxu0 0.0
    %772 = vmatprep.subr.mxu0 0.0
    %773 = vmatpush1.msra.mxu0 0.0
    %774 = vmatprep.subr.mxu0 0.0
    %775 = vmatpush1.msra.mxu0 0.0
    %776 = vmatprep.subr.mxu0 0.0
    %777 = vmatpush1.msra.mxu0 0.0
    %778 = vmatprep.subr.mxu0 0.0
    %779 = vmatpush1.msra.mxu0 0.0
    %780 = vmatprep.subr.mxu0 0.0
    %781 = vmatpush1.msra.mxu0 0.0
    %782 = vmatprep.subr.mxu0 0.0
    %783 = vmatpush1.msra.mxu0 0.0
    %784 = vmatprep.subr.mxu0 0.0
    %785 = vmatpush1.msra.mxu0 0.0
    %786 = vmatprep.subr.mxu0 0.0
    %787 = vmatpush1.msra.mxu0 0.0
    %788 = vmatprep.subr.mxu0 0.0
    %789 = vmatpush1.msra.mxu0 0.0
    %790 = vmatprep.subr.mxu0 0.0
    %791 = vmatpush1.msra.mxu0 0.0
    %792 = vmatprep.subr.mxu0 0.0
    %793 = vmatpush1.msra.mxu0 0.0
    %794 = vmatprep.mubr.f32.mxu0 0.0
    %795 = vmatmul.mubr.f32.gmra.mrb[0].mxu0 %v728
    %v796 = vpop.f32.mrb[0].mxu0
    %v797 = vadd.f32 0.0, %v796
    %v798 = vpop.f32.mrb[0].mxu0
    %799 = vdwg.mxu0
    %v800 = vadd.f32 %v726, %v797
    %v801 = vtanh.pop %v800
    %s802 = scalar_lea.vmem [#allocation2], 64
    %v803 = vld [vmem:[%s802] sm:$0xff]
    %v805 = vsel %vm166, %v801, 0
    %807 = vmatprep.subr.mxu0 0.0
    %808 = vmatpush1.msra.mxu0 %v183
    %809 = vmatprep.subr.mxu0 0.0
    %810 = vmatpush1.msra.mxu0 %v184
    %811 = vmatprep.subr.mxu0 0.0
    %812 = vmatpush1.msra.mxu0 %v185
    %813 = vmatprep.subr.mxu0 0.0
    %814 = vmatpush1.msra.mxu0 %v186
    %815 = vmatprep.subr.mxu0 0.0
    %816 = vmatpush1.msra.mxu0 0.0
    %817 = vmatprep.subr.mxu0 0.0
    %818 = vmatpush1.msra.mxu0 0.0
    %819 = vmatprep.subr.mxu0 0.0
    %820 = vmatpush1.msra.mxu0 0.0
    %821 = vmatprep.subr.mxu0 0.0
    %822 = vmatpush1.msra.mxu0 0.0
    %823 = vmatprep.subr.mxu0 0.0
    %824 = vmatpush1.msra.mxu0 0.0
    %825 = vmatprep.subr.mxu0 0.0
    %826 = vmatpush1.msra.mxu0 0.0
    %827 = vmatprep.subr.mxu0 0.0
    %828 = vmatpush1.msra.mxu0 0.0
    %829 = vmatprep.subr.mxu0 0.0
    %830 = vmatpush1.msra.mxu0 0.0
    %831 = vmatprep.subr.mxu0 0.0
    %832 = vmatpush1.msra.mxu0 0.0
    %833 = vmatprep.subr.mxu0 0.0
    %834 = vmatpush1.msra.mxu0 0.0
    %835 = vmatprep.subr.mxu0 0.0
    %836 = vmatpush1.msra.mxu0 0.0
    %837 = vmatprep.subr.mxu0 0.0
    %838 = vmatpush1.msra.mxu0 0.0
    %839 = vmatprep.subr.mxu0 0.0
    %840 = vmatpush1.msra.mxu0 0.0
    %841 = vmatprep.subr.mxu0 0.0
    %842 = vmatpush1.msra.mxu0 0.0
    %843 = vmatprep.subr.mxu0 0.0
    %844 = vmatpush1.msra.mxu0 0.0
    %845 = vmatprep.subr.mxu0 0.0
    %846 = vmatpush1.msra.mxu0 0.0
    %847 = vmatprep.subr.mxu0 0.0
    %848 = vmatpush1.msra.mxu0 0.0
    %849 = vmatprep.subr.mxu0 0.0
    %850 = vmatpush1.msra.mxu0 0.0
    %851 = vmatprep.subr.mxu0 0.0
    %852 = vmatpush1.msra.mxu0 0.0
    %853 = vmatprep.subr.mxu0 0.0
    %854 = vmatpush1.msra.mxu0 0.0
    %855 = vmatprep.subr.mxu0 0.0
    %856 = vmatpush1.msra.mxu0 0.0
    %857 = vmatprep.subr.mxu0 0.0
    %858 = vmatpush1.msra.mxu0 0.0
    %859 = vmatprep.subr.mxu0 0.0
    %860 = vmatpush1.msra.mxu0 0.0
    %861 = vmatprep.subr.mxu0 0.0
    %862 = vmatpush1.msra.mxu0 0.0
    %863 = vmatprep.subr.mxu0 0.0
    %864 = vmatpush1.msra.mxu0 0.0
    %865 = vmatprep.subr.mxu0 0.0
    %866 = vmatpush1.msra.mxu0 0.0
    %867 = vmatprep.subr.mxu0 0.0
    %868 = vmatpush1.msra.mxu0 0.0
    %869 = vmatprep.subr.mxu0 0.0
    %870 = vmatpush1.msra.mxu0 0.0
    %871 = vmatprep.mubr.f32.mxu0 0.0
    %872 = vmatmul.mubr.f32.gmra.mrb[0].mxu0 %v805
    %v873 = vpop.f32.mrb[0].mxu0
    %v874 = vadd.f32 0.0, %v873
    %v875 = vpop.f32.mrb[0].mxu0
    %876 = vdwg.mxu0
    %v877 = vadd.f32 %v803, %v874
    %v878 = vtanh.pop %v877
    %s879 = scalar_lea.vmem [#allocation2], 72
    %v880 = vld [vmem:[%s879] sm:$0xff]
    %v882 = vsel %vm166, %v878, 0
    %884 = vmatprep.subr.mxu0 0.0
    %885 = vmatpush1.msra.mxu0 %v183
    %886 = vmatprep.subr.mxu0 0.0
    %887 = vmatpush1.msra.mxu0 %v184
    %888 = vmatprep.subr.mxu0 0.0
    %889 = vmatpush1.msra.mxu0 %v185
    %890 = vmatprep.subr.mxu0 0.0
    %891 = vmatpush1.msra.mxu0 %v186
    %892 = vmatprep.subr.mxu0 0.0
    %893 = vmatpush1.msra.mxu0 0.0
    %894 = vmatprep.subr.mxu0 0.0
    %895 = vmatpush1.msra.mxu0 0.0
    %896 = vmatprep.subr.mxu0 0.0
    %897 = vmatpush1.msra.mxu0 0.0
    %898 = vmatprep.subr.mxu0 0.0
    %899 = vmatpush1.msra.mxu0 0.0
    %900 = vmatprep.subr.mxu0 0.0
    %901 = vmatpush1.msra.mxu0 0.0
    %902 = vmatprep.subr.mxu0 0.0
    %903 = vmatpush1.msra.mxu0 0.0
    %904 = vmatprep.subr.mxu0 0.0
    %905 = vmatpush1.msra.mxu0 0.0
    %906 = vmatprep.subr.mxu0 0.0
    %907 = vmatpush1.msra.mxu0 0.0
    %908 = vmatprep.subr.mxu0 0.0
    %909 = vmatpush1.msra.mxu0 0.0
    %910 = vmatprep.subr.mxu0 0.0
    %911 = vmatpush1.msra.mxu0 0.0
    %912 = vmatprep.subr.mxu0 0.0
    %913 = vmatpush1.msra.mxu0 0.0
    %914 = vmatprep.subr.mxu0 0.0
    %915 = vmatpush1.msra.mxu0 0.0
    %916 = vmatprep.subr.mxu0 0.0
    %917 = vmatpush1.msra.mxu0 0.0
    %918 = vmatprep.subr.mxu0 0.0
    %919 = vmatpush1.msra.mxu0 0.0
    %920 = vmatprep.subr.mxu0 0.0
    %921 = vmatpush1.msra.mxu0 0.0
    %922 = vmatprep.subr.mxu0 0.0
    %923 = vmatpush1.msra.mxu0 0.0
    %924 = vmatprep.subr.mxu0 0.0
    %925 = vmatpush1.msra.mxu0 0.0
    %926 = vmatprep.subr.mxu0 0.0
    %927 = vmatpush1.msra.mxu0 0.0
    %928 = vmatprep.subr.mxu0 0.0
    %929 = vmatpush1.msra.mxu0 0.0
    %930 = vmatprep.subr.mxu0 0.0
    %931 = vmatpush1.msra.mxu0 0.0
    %932 = vmatprep.subr.mxu0 0.0
    %933 = vmatpush1.msra.mxu0 0.0
    %934 = vmatprep.subr.mxu0 0.0
    %935 = vmatpush1.msra.mxu0 0.0
    %936 = vmatprep.subr.mxu0 0.0
    %937 = vmatpush1.msra.mxu0 0.0
    %938 = vmatprep.subr.mxu0 0.0
    %939 = vmatpush1.msra.mxu0 0.0
    %940 = vmatprep.subr.mxu0 0.0
    %941 = vmatpush1.msra.mxu0 0.0
    %942 = vmatprep.subr.mxu0 0.0
    %943 = vmatpush1.msra.mxu0 0.0
    %944 = vmatprep.subr.mxu0 0.0
    %945 = vmatpush1.msra.mxu0 0.0
    %946 = vmatprep.subr.mxu0 0.0
    %947 = vmatpush1.msra.mxu0 0.0
    %948 = vmatprep.mubr.f32.mxu0 0.0
    %949 = vmatmul.mubr.f32.gmra.mrb[0].mxu0 %v882
    %v950 = vpop.f32.mrb[0].mxu0
    %v951 = vadd.f32 0.0, %v950
    %v952 = vpop.f32.mrb[0].mxu0
    %953 = vdwg.mxu0
    %v954 = vadd.f32 %v880, %v951
    %v955 = vtanh.pop %v954
    %s956 = scalar_lea.vmem [#allocation2], 80
    %v957 = vld [vmem:[%s956] sm:$0xff]
    %v959 = vsel %vm166, %v955, 0
    %961 = vmatprep.subr.mxu0 0.0
    %962 = vmatpush1.msra.mxu0 %v183
    %963 = vmatprep.subr.mxu0 0.0
    %964 = vmatpush1.msra.mxu0 %v184
    %965 = vmatprep.subr.mxu0 0.0
    %966 = vmatpush1.msra.mxu0 %v185
    %967 = vmatprep.subr.mxu0 0.0
    %968 = vmatpush1.msra.mxu0 %v186
    %969 = vmatprep.subr.mxu0 0.0
    %970 = vmatpush1.msra.mxu0 0.0
    %971 = vmatprep.subr.mxu0 0.0
    %972 = vmatpush1.msra.mxu0 0.0
    %973 = vmatprep.subr.mxu0 0.0
    %974 = vmatpush1.msra.mxu0 0.0
    %975 = vmatprep.subr.mxu0 0.0
    %976 = vmatpush1.msra.mxu0 0.0
    %977 = vmatprep.subr.mxu0 0.0
    %978 = vmatpush1.msra.mxu0 0.0
    %979 = vmatprep.subr.mxu0 0.0
    %980 = vmatpush1.msra.mxu0 0.0
    %981 = vmatprep.subr.mxu0 0.0
    %982 = vmatpush1.msra.mxu0 0.0
    %983 = vmatprep.subr.mxu0 0.0
    %984 = vmatpush1.msra.mxu0 0.0
    %985 = vmatprep.subr.mxu0 0.0
    %986 = vmatpush1.msra.mxu0 0.0
    %987 = vmatprep.subr.mxu0 0.0
    %988 = vmatpush1.msra.mxu0 0.0
    %989 = vmatprep.subr.mxu0 0.0
    %990 = vmatpush1.msra.mxu0 0.0
    %991 = vmatprep.subr.mxu0 0.0
    %992 = vmatpush1.msra.mxu0 0.0
    %993 = vmatprep.subr.mxu0 0.0
    %994 = vmatpush1.msra.mxu0 0.0
    %995 = vmatprep.subr.mxu0 0.0
    %996 = vmatpush1.msra.mxu0 0.0
    %997 = vmatprep.subr.mxu0 0.0
    %998 = vmatpush1.msra.mxu0 0.0
    %999 = vmatprep.subr.mxu0 0.0
    %1000 = vmatpush1.msra.mxu0 0.0
    %1001 = vmatprep.subr.mxu0 0.0
    %1002 = vmatpush1.msra.mxu0 0.0
    %1003 = vmatprep.subr.mxu0 0.0
    %1004 = vmatpush1.msra.mxu0 0.0
    %1005 = vmatprep.subr.mxu0 0.0
    %1006 = vmatpush1.msra.mxu0 0.0
    %1007 = vmatprep.subr.mxu0 0.0
    %1008 = vmatpush1.msra.mxu0 0.0
    %1009 = vmatprep.subr.mxu0 0.0
    %1010 = vmatpush1.msra.mxu0 0.0
    %1011 = vmatprep.subr.mxu0 0.0
    %1012 = vmatpush1.msra.mxu0 0.0
    %1013 = vmatprep.subr.mxu0 0.0
    %1014 = vmatpush1.msra.mxu0 0.0
    %1015 = vmatprep.subr.mxu0 0.0
    %1016 = vmatpush1.msra.mxu0 0.0
    %1017 = vmatprep.subr.mxu0 0.0
    %1018 = vmatpush1.msra.mxu0 0.0
    %1019 = vmatprep.subr.mxu0 0.0
    %1020 = vmatpush1.msra.mxu0 0.0
    %1021 = vmatprep.subr.mxu0 0.0
    %1022 = vmatpush1.msra.mxu0 0.0
    %1023 = vmatprep.subr.mxu0 0.0
    %1024 = vmatpush1.msra.mxu0 0.0
    %1025 = vmatprep.mubr.f32.mxu0 0.0
    %1026 = vmatmul.mubr.f32.gmra.mrb[0].mxu0 %v959
    %v1027 = vpop.f32.mrb[0].mxu0
    %v1028 = vadd.f32 0.0, %v1027
    %v1029 = vpop.f32.mrb[0].mxu0
    %1030 = vdwg.mxu0
    %v1031 = vadd.f32 %v957, %v1028
    %v1032 = vtanh.pop %v1031
    %s1033 = scalar_lea.vmem [#allocation2], 88
    %v1034 = vld [vmem:[%s1033] sm:$0xff]
    %v1036 = vsel %vm166, %v1032, 0
    %1038 = vmatprep.subr.mxu0 0.0
    %1039 = vmatpush1.msra.mxu0 %v183
    %1040 = vmatprep.subr.mxu0 0.0
    %1041 = vmatpush1.msra.mxu0 %v184
    %1042 = vmatprep.subr.mxu0 0.0
    %1043 = vmatpush1.msra.mxu0 %v185
    %1044 = vmatprep.subr.mxu0 0.0
    %1045 = vmatpush1.msra.mxu0 %v186
    %1046 = vmatprep.subr.mxu0 0.0
    %1047 = vmatpush1.msra.mxu0 0.0
    %1048 = vmatprep.subr.mxu0 0.0
    %1049 = vmatpush1.msra.mxu0 0.0
    %1050 = vmatprep.subr.mxu0 0.0
    %1051 = vmatpush1.msra.mxu0 0.0
    %1052 = vmatprep.subr.mxu0 0.0
    %1053 = vmatpush1.msra.mxu0 0.0
    %1054 = vmatprep.subr.mxu0 0.0
    %1055 = vmatpush1.msra.mxu0 0.0
    %1056 = vmatprep.subr.mxu0 0.0
    %1057 = vmatpush1.msra.mxu0 0.0
    %1058 = vmatprep.subr.mxu0 0.0
    %1059 = vmatpush1.msra.mxu0 0.0
    %1060 = vmatprep.subr.mxu0 0.0
    %1061 = vmatpush1.msra.mxu0 0.0
    %1062 = vmatprep.subr.mxu0 0.0
    %1063 = vmatpush1.msra.mxu0 0.0
    %1064 = vmatprep.subr.mxu0 0.0
    %1065 = vmatpush1.msra.mxu0 0.0
    %1066 = vmatprep.subr.mxu0 0.0
    %1067 = vmatpush1.msra.mxu0 0.0
    %1068 = vmatprep.subr.mxu0 0.0
    %1069 = vmatpush1.msra.mxu0 0.0
    %1070 = vmatprep.subr.mxu0 0.0
    %1071 = vmatpush1.msra.mxu0 0.0
    %1072 = vmatprep.subr.mxu0 0.0
    %1073 = vmatpush1.msra.mxu0 0.0
    %1074 = vmatprep.subr.mxu0 0.0
    %1075 = vmatpush1.msra.mxu0 0.0
    %1076 = vmatprep.subr.mxu0 0.0
    %1077 = vmatpush1.msra.mxu0 0.0
    %1078 = vmatprep.subr.mxu0 0.0
    %1079 = vmatpush1.msra.mxu0 0.0
    %1080 = vmatprep.subr.mxu0 0.0
    %1081 = vmatpush1.msra.mxu0 0.0
    %1082 = vmatprep.subr.mxu0 0.0
    %1083 = vmatpush1.msra.mxu0 0.0
    %1084 = vmatprep.subr.mxu0 0.0
    %1085 = vmatpush1.msra.mxu0 0.0
    %1086 = vmatprep.subr.mxu0 0.0
    %1087 = vmatpush1.msra.mxu0 0.0
    %1088 = vmatprep.subr.mxu0 0.0
    %1089 = vmatpush1.msra.mxu0 0.0
    %1090 = vmatprep.subr.mxu0 0.0
    %1091 = vmatpush1.msra.mxu0 0.0
    %1092 = vmatprep.subr.mxu0 0.0
    %1093 = vmatpush1.msra.mxu0 0.0
    %1094 = vmatprep.subr.mxu0 0.0
    %1095 = vmatpush1.msra.mxu0 0.0
    %1096 = vmatprep.subr.mxu0 0.0
    %1097 = vmatpush1.msra.mxu0 0.0
    %1098 = vmatprep.subr.mxu0 0.0
    %1099 = vmatpush1.msra.mxu0 0.0
    %1100 = vmatprep.subr.mxu0 0.0
    %1101 = vmatpush1.msra.mxu0 0.0
    %1102 = vmatprep.mubr.f32.mxu0 0.0
    %1103 = vmatmul.mubr.f32.gmra.mrb[0].mxu0 %v1036
    %v1104 = vpop.f32.mrb[0].mxu0
    %v1105 = vadd.f32 0.0, %v1104
    %v1106 = vpop.f32.mrb[0].mxu0
    %1107 = vdwg.mxu0
    %v1108 = vadd.f32 %v1034, %v1105
    %v1109 = vtanh.pop %v1108
    %s1110 = scalar_lea.vmem [#allocation2], 96
    %v1111 = vld [vmem:[%s1110] sm:$0xff]
    %v1113 = vsel %vm166, %v1109, 0
    %1115 = vmatprep.subr.mxu0 0.0
    %1116 = vmatpush1.msra.mxu0 %v183
    %1117 = vmatprep.subr.mxu0 0.0
    %1118 = vmatpush1.msra.mxu0 %v184
    %1119 = vmatprep.subr.mxu0 0.0
    %1120 = vmatpush1.msra.mxu0 %v185
    %1121 = vmatprep.subr.mxu0 0.0
    %1122 = vmatpush1.msra.mxu0 %v186
    %1123 = vmatprep.subr.mxu0 0.0
    %1124 = vmatpush1.msra.mxu0 0.0
    %1125 = vmatprep.subr.mxu0 0.0
    %1126 = vmatpush1.msra.mxu0 0.0
    %1127 = vmatprep.subr.mxu0 0.0
    %1128 = vmatpush1.msra.mxu0 0.0
    %1129 = vmatprep.subr.mxu0 0.0
    %1130 = vmatpush1.msra.mxu0 0.0
    %1131 = vmatprep.subr.mxu0 0.0
    %1132 = vmatpush1.msra.mxu0 0.0
    %1133 = vmatprep.subr.mxu0 0.0
    %1134 = vmatpush1.msra.mxu0 0.0
    %1135 = vmatprep.subr.mxu0 0.0
    %1136 = vmatpush1.msra.mxu0 0.0
    %1137 = vmatprep.subr.mxu0 0.0
    %1138 = vmatpush1.msra.mxu0 0.0
    %1139 = vmatprep.subr.mxu0 0.0
    %1140 = vmatpush1.msra.mxu0 0.0
    %1141 = vmatprep.subr.mxu0 0.0
    %1142 = vmatpush1.msra.mxu0 0.0
    %1143 = vmatprep.subr.mxu0 0.0
    %1144 = vmatpush1.msra.mxu0 0.0
    %1145 = vmatprep.subr.mxu0 0.0
    %1146 = vmatpush1.msra.mxu0 0.0
    %1147 = vmatprep.subr.mxu0 0.0
    %1148 = vmatpush1.msra.mxu0 0.0
    %1149 = vmatprep.subr.mxu0 0.0
    %1150 = vmatpush1.msra.mxu0 0.0
    %1151 = vmatprep.subr.mxu0 0.0
    %1152 = vmatpush1.msra.mxu0 0.0
    %1153 = vmatprep.subr.mxu0 0.0
    %1154 = vmatpush1.msra.mxu0 0.0
    %1155 = vmatprep.subr.mxu0 0.0
    %1156 = vmatpush1.msra.mxu0 0.0
    %1157 = vmatprep.subr.mxu0 0.0
    %1158 = vmatpush1.msra.mxu0 0.0
    %1159 = vmatprep.subr.mxu0 0.0
    %1160 = vmatpush1.msra.mxu0 0.0
    %1161 = vmatprep.subr.mxu0 0.0
    %1162 = vmatpush1.msra.mxu0 0.0
    %1163 = vmatprep.subr.mxu0 0.0
    %1164 = vmatpush1.msra.mxu0 0.0
    %1165 = vmatprep.subr.mxu0 0.0
    %1166 = vmatpush1.msra.mxu0 0.0
    %1167 = vmatprep.subr.mxu0 0.0
    %1168 = vmatpush1.msra.mxu0 0.0
    %1169 = vmatprep.subr.mxu0 0.0
    %1170 = vmatpush1.msra.mxu0 0.0
    %1171 = vmatprep.subr.mxu0 0.0
    %1172 = vmatpush1.msra.mxu0 0.0
    %1173 = vmatprep.subr.mxu0 0.0
    %1174 = vmatpush1.msra.mxu0 0.0
    %1175 = vmatprep.subr.mxu0 0.0
    %1176 = vmatpush1.msra.mxu0 0.0
    %1177 = vmatprep.subr.mxu0 0.0
    %1178 = vmatpush1.msra.mxu0 0.0
    %1179 = vmatprep.mubr.f32.mxu0 0.0
    %1180 = vmatmul.mubr.f32.gmra.mrb[0].mxu0 %v1113
    %v1181 = vpop.f32.mrb[0].mxu0
    %v1182 = vadd.f32 0.0, %v1181
    %v1183 = vpop.f32.mrb[0].mxu0
    %1184 = vdwg.mxu0
    %v1185 = vadd.f32 %v1111, %v1182
    %v1186 = vtanh.pop %v1185
    %s1187 = scalar_lea.vmem [#allocation2], 104
    %v1188 = vld [vmem:[%s1187] sm:$0xff]
    %v1190 = vsel %vm166, %v1186, 0
    %1192 = vmatprep.subr.mxu0 0.0
    %1193 = vmatpush1.msra.mxu0 %v183
    %1194 = vmatprep.subr.mxu0 0.0
    %1195 = vmatpush1.msra.mxu0 %v184
    %1196 = vmatprep.subr.mxu0 0.0
    %1197 = vmatpush1.msra.mxu0 %v185
    %1198 = vmatprep.subr.mxu0 0.0
    %1199 = vmatpush1.msra.mxu0 %v186
    %1200 = vmatprep.subr.mxu0 0.0
    %1201 = vmatpush1.msra.mxu0 0.0
    %1202 = vmatprep.subr.mxu0 0.0
    %1203 = vmatpush1.msra.mxu0 0.0
    %1204 = vmatprep.subr.mxu0 0.0
    %1205 = vmatpush1.msra.mxu0 0.0
    %1206 = vmatprep.subr.mxu0 0.0
    %1207 = vmatpush1.msra.mxu0 0.0
    %1208 = vmatprep.subr.mxu0 0.0
    %1209 = vmatpush1.msra.mxu0 0.0
    %1210 = vmatprep.subr.mxu0 0.0
    %1211 = vmatpush1.msra.mxu0 0.0
    %1212 = vmatprep.subr.mxu0 0.0
    %1213 = vmatpush1.msra.mxu0 0.0
    %1214 = vmatprep.subr.mxu0 0.0
    %1215 = vmatpush1.msra.mxu0 0.0
    %1216 = vmatprep.subr.mxu0 0.0
    %1217 = vmatpush1.msra.mxu0 0.0
    %1218 = vmatprep.subr.mxu0 0.0
    %1219 = vmatpush1.msra.mxu0 0.0
    %1220 = vmatprep.subr.mxu0 0.0
    %1221 = vmatpush1.msra.mxu0 0.0
    %1222 = vmatprep.subr.mxu0 0.0
    %1223 = vmatpush1.msra.mxu0 0.0
    %1224 = vmatprep.subr.mxu0 0.0
    %1225 = vmatpush1.msra.mxu0 0.0
    %1226 = vmatprep.subr.mxu0 0.0
    %1227 = vmatpush1.msra.mxu0 0.0
    %1228 = vmatprep.subr.mxu0 0.0
    %1229 = vmatpush1.msra.mxu0 0.0
    %1230 = vmatprep.subr.mxu0 0.0
    %1231 = vmatpush1.msra.mxu0 0.0
    %1232 = vmatprep.subr.mxu0 0.0
    %1233 = vmatpush1.msra.mxu0 0.0
    %1234 = vmatprep.subr.mxu0 0.0
    %1235 = vmatpush1.msra.mxu0 0.0
    %1236 = vmatprep.subr.mxu0 0.0
    %1237 = vmatpush1.msra.mxu0 0.0
    %1238 = vmatprep.subr.mxu0 0.0
    %1239 = vmatpush1.msra.mxu0 0.0
    %1240 = vmatprep.subr.mxu0 0.0
    %1241 = vmatpush1.msra.mxu0 0.0
    %1242 = vmatprep.subr.mxu0 0.0
    %1243 = vmatpush1.msra.mxu0 0.0
    %1244 = vmatprep.subr.mxu0 0.0
    %1245 = vmatpush1.msra.mxu0 0.0
    %1246 = vmatprep.subr.mxu0 0.0
    %1247 = vmatpush1.msra.mxu0 0.0
    %1248 = vmatprep.subr.mxu0 0.0
    %1249 = vmatpush1.msra.mxu0 0.0
    %1250 = vmatprep.subr.mxu0 0.0
    %1251 = vmatpush1.msra.mxu0 0.0
    %1252 = vmatprep.subr.mxu0 0.0
    %1253 = vmatpush1.msra.mxu0 0.0
    %1254 = vmatprep.subr.mxu0 0.0
    %1255 = vmatpush1.msra.mxu0 0.0
    %1256 = vmatprep.mubr.f32.mxu0 0.0
    %1257 = vmatmul.mubr.f32.gmra.mrb[0].mxu0 %v1190
    %v1258 = vpop.f32.mrb[0].mxu0
    %v1259 = vadd.f32 0.0, %v1258
    %v1260 = vpop.f32.mrb[0].mxu0
    %1261 = vdwg.mxu0
    %v1262 = vadd.f32 %v1188, %v1259
    %v1263 = vtanh.pop %v1262
    %s1264 = scalar_lea.vmem [#allocation2], 112
    %v1265 = vld [vmem:[%s1264] sm:$0xff]
    %v1267 = vsel %vm166, %v1263, 0
    %1269 = vmatprep.subr.mxu0 0.0
    %1270 = vmatpush1.msra.mxu0 %v183
    %1271 = vmatprep.subr.mxu0 0.0
    %1272 = vmatpush1.msra.mxu0 %v184
    %1273 = vmatprep.subr.mxu0 0.0
    %1274 = vmatpush1.msra.mxu0 %v185
    %1275 = vmatprep.subr.mxu0 0.0
    %1276 = vmatpush1.msra.mxu0 %v186
    %1277 = vmatprep.subr.mxu0 0.0
    %1278 = vmatpush1.msra.mxu0 0.0
    %1279 = vmatprep.subr.mxu0 0.0
    %1280 = vmatpush1.msra.mxu0 0.0
    %1281 = vmatprep.subr.mxu0 0.0
    %1282 = vmatpush1.msra.mxu0 0.0
    %1283 = vmatprep.subr.mxu0 0.0
    %1284 = vmatpush1.msra.mxu0 0.0
    %1285 = vmatprep.subr.mxu0 0.0
    %1286 = vmatpush1.msra.mxu0 0.0
    %1287 = vmatprep.subr.mxu0 0.0
    %1288 = vmatpush1.msra.mxu0 0.0
    %1289 = vmatprep.subr.mxu0 0.0
    %1290 = vmatpush1.msra.mxu0 0.0
    %1291 = vmatprep.subr.mxu0 0.0
    %1292 = vmatpush1.msra.mxu0 0.0
    %1293 = vmatprep.subr.mxu0 0.0
    %1294 = vmatpush1.msra.mxu0 0.0
    %1295 = vmatprep.subr.mxu0 0.0
    %1296 = vmatpush1.msra.mxu0 0.0
    %1297 = vmatprep.subr.mxu0 0.0
    %1298 = vmatpush1.msra.mxu0 0.0
    %1299 = vmatprep.subr.mxu0 0.0
    %1300 = vmatpush1.msra.mxu0 0.0
    %1301 = vmatprep.subr.mxu0 0.0
    %1302 = vmatpush1.msra.mxu0 0.0
    %1303 = vmatprep.subr.mxu0 0.0
    %1304 = vmatpush1.msra.mxu0 0.0
    %1305 = vmatprep.subr.mxu0 0.0
    %1306 = vmatpush1.msra.mxu0 0.0
    %1307 = vmatprep.subr.mxu0 0.0
    %1308 = vmatpush1.msra.mxu0 0.0
    %1309 = vmatprep.subr.mxu0 0.0
    %1310 = vmatpush1.msra.mxu0 0.0
    %1311 = vmatprep.subr.mxu0 0.0
    %1312 = vmatpush1.msra.mxu0 0.0
    %1313 = vmatprep.subr.mxu0 0.0
    %1314 = vmatpush1.msra.mxu0 0.0
    %1315 = vmatprep.subr.mxu0 0.0
    %1316 = vmatpush1.msra.mxu0 0.0
    %1317 = vmatprep.subr.mxu0 0.0
    %1318 = vmatpush1.msra.mxu0 0.0
    %1319 = vmatprep.subr.mxu0 0.0
    %1320 = vmatpush1.msra.mxu0 0.0
    %1321 = vmatprep.subr.mxu0 0.0
    %1322 = vmatpush1.msra.mxu0 0.0
    %1323 = vmatprep.subr.mxu0 0.0
    %1324 = vmatpush1.msra.mxu0 0.0
    %1325 = vmatprep.subr.mxu0 0.0
    %1326 = vmatpush1.msra.mxu0 0.0
    %1327 = vmatprep.subr.mxu0 0.0
    %1328 = vmatpush1.msra.mxu0 0.0
    %1329 = vmatprep.subr.mxu0 0.0
    %1330 = vmatpush1.msra.mxu0 0.0
    %1331 = vmatprep.subr.mxu0 0.0
    %1332 = vmatpush1.msra.mxu0 0.0
    %1333 = vmatprep.mubr.f32.mxu0 0.0
    %1334 = vmatmul.mubr.f32.gmra.mrb[0].mxu0 %v1267
    %v1335 = vpop.f32.mrb[0].mxu0
    %v1336 = vadd.f32 0.0, %v1335
    %v1337 = vpop.f32.mrb[0].mxu0
    %1338 = vdwg.mxu0
    %v1339 = vadd.f32 %v1265, %v1336
    %v1340 = vtanh.pop %v1339
    %s1341 = scalar_lea.vmem [#allocation2], 120
    %v1342 = vld [vmem:[%s1341] sm:$0xff]
    %v1344 = vsel %vm166, %v1340, 0
    %1346 = vmatprep.subr.mxu0 0.0
    %1347 = vmatpush1.msra.mxu0 %v183
    %1348 = vmatprep.subr.mxu0 0.0
    %1349 = vmatpush1.msra.mxu0 %v184
    %1350 = vmatprep.subr.mxu0 0.0
    %1351 = vmatpush1.msra.mxu0 %v185
    %1352 = vmatprep.subr.mxu0 0.0
    %1353 = vmatpush1.msra.mxu0 %v186
    %1354 = vmatprep.subr.mxu0 0.0
    %1355 = vmatpush1.msra.mxu0 0.0
    %1356 = vmatprep.subr.mxu0 0.0
    %1357 = vmatpush1.msra.mxu0 0.0
    %1358 = vmatprep.subr.mxu0 0.0
    %1359 = vmatpush1.msra.mxu0 0.0
    %1360 = vmatprep.subr.mxu0 0.0
    %1361 = vmatpush1.msra.mxu0 0.0
    %1362 = vmatprep.subr.mxu0 0.0
    %1363 = vmatpush1.msra.mxu0 0.0
    %1364 = vmatprep.subr.mxu0 0.0
    %1365 = vmatpush1.msra.mxu0 0.0
    %1366 = vmatprep.subr.mxu0 0.0
    %1367 = vmatpush1.msra.mxu0 0.0
    %1368 = vmatprep.subr.mxu0 0.0
    %1369 = vmatpush1.msra.mxu0 0.0
    %1370 = vmatprep.subr.mxu0 0.0
    %1371 = vmatpush1.msra.mxu0 0.0
    %1372 = vmatprep.subr.mxu0 0.0
    %1373 = vmatpush1.msra.mxu0 0.0
    %1374 = vmatprep.subr.mxu0 0.0
    %1375 = vmatpush1.msra.mxu0 0.0
    %1376 = vmatprep.subr.mxu0 0.0
    %1377 = vmatpush1.msra.mxu0 0.0
    %1378 = vmatprep.subr.mxu0 0.0
    %1379 = vmatpush1.msra.mxu0 0.0
    %1380 = vmatprep.subr.mxu0 0.0
    %1381 = vmatpush1.msra.mxu0 0.0
    %1382 = vmatprep.subr.mxu0 0.0
    %1383 = vmatpush1.msra.mxu0 0.0
    %1384 = vmatprep.subr.mxu0 0.0
    %1385 = vmatpush1.msra.mxu0 0.0
    %1386 = vmatprep.subr.mxu0 0.0
    %1387 = vmatpush1.msra.mxu0 0.0
    %1388 = vmatprep.subr.mxu0 0.0
    %1389 = vmatpush1.msra.mxu0 0.0
    %1390 = vmatprep.subr.mxu0 0.0
    %1391 = vmatpush1.msra.mxu0 0.0
    %1392 = vmatprep.subr.mxu0 0.0
    %1393 = vmatpush1.msra.mxu0 0.0
    %1394 = vmatprep.subr.mxu0 0.0
    %1395 = vmatpush1.msra.mxu0 0.0
    %1396 = vmatprep.subr.mxu0 0.0
    %1397 = vmatpush1.msra.mxu0 0.0
    %1398 = vmatprep.subr.mxu0 0.0
    %1399 = vmatpush1.msra.mxu0 0.0
    %1400 = vmatprep.subr.mxu0 0.0
    %1401 = vmatpush1.msra.mxu0 0.0
    %1402 = vmatprep.subr.mxu0 0.0
    %1403 = vmatpush1.msra.mxu0 0.0
    %1404 = vmatprep.subr.mxu0 0.0
    %1405 = vmatpush1.msra.mxu0 0.0
    %1406 = vmatprep.subr.mxu0 0.0
    %1407 = vmatpush1.msra.mxu0 0.0
    %1408 = vmatprep.subr.mxu0 0.0
    %1409 = vmatpush1.msra.mxu0 0.0
    %1410 = vmatprep.mubr.f32.mxu0 0.0
    %1411 = vmatmul.mubr.f32.gmra.mrb[0].mxu0 %v1344
    %v1412 = vpop.f32.mrb[0].mxu0
    %v1413 = vadd.f32 0.0, %v1412
    %v1414 = vpop.f32.mrb[0].mxu0
    %1415 = vdwg.mxu0
    %v1416 = vadd.f32 %v1342, %v1413
    %v1417 = vtanh.pop %v1416
    %v1418 = vld [vmem:[%s4] sm:$0xff]
    %v1419 = vld [vmem:[%s4 + $0x8] sm:$0xff]
    %v1420 = vld [vmem:[%s4 + $0x10] sm:$0xff]
    %v1421 = vld [vmem:[%s4 + $0x18] sm:$0xff]
    %v1422 = vld [vmem:[%s5] sm:$0x1]
    %v1424 = vlaneseq
    %v1425 = vshrl.u32 %v1424, 7
    %v1426 = vsub.s32 0, %v1425
    %v1427 = vrot.slane %v1422, %v1426
    %v1430 = vsel %vm166, %v1417, 0
    %1432 = vmatprep.subr.mxu0 0.0
    %1433 = vmatpush1.msra.mxu0 %v1418
    %1434 = vmatprep.subr.mxu0 0.0
    %1435 = vmatpush1.msra.mxu0 %v1419
    %1436 = vmatprep.subr.mxu0 0.0
    %1437 = vmatpush1.msra.mxu0 %v1420
    %1438 = vmatprep.subr.mxu0 0.0
    %1439 = vmatpush1.msra.mxu0 %v1421
    %1440 = vmatprep.subr.mxu0 0.0
    %1441 = vmatpush1.msra.mxu0 0.0
    %1442 = vmatprep.subr.mxu0 0.0
    %1443 = vmatpush1.msra.mxu0 0.0
    %1444 = vmatprep.subr.mxu0 0.0
    %1445 = vmatpush1.msra.mxu0 0.0
    %1446 = vmatprep.subr.mxu0 0.0
    %1447 = vmatpush1.msra.mxu0 0.0
    %1448 = vmatprep.subr.mxu0 0.0
    %1449 = vmatpush1.msra.mxu0 0.0
    %1450 = vmatprep.subr.mxu0 0.0
    %1451 = vmatpush1.msra.mxu0 0.0
    %1452 = vmatprep.subr.mxu0 0.0
    %1453 = vmatpush1.msra.mxu0 0.0
    %1454 = vmatprep.subr.mxu0 0.0
    %1455 = vmatpush1.msra.mxu0 0.0
    %1456 = vmatprep.subr.mxu0 0.0
    %1457 = vmatpush1.msra.mxu0 0.0
    %1458 = vmatprep.subr.mxu0 0.0
    %1459 = vmatpush1.msra.mxu0 0.0
    %1460 = vmatprep.subr.mxu0 0.0
    %1461 = vmatpush1.msra.mxu0 0.0
    %1462 = vmatprep.subr.mxu0 0.0
    %1463 = vmatpush1.msra.mxu0 0.0
    %1464 = vmatprep.subr.mxu0 0.0
    %1465 = vmatpush1.msra.mxu0 0.0
    %1466 = vmatprep.subr.mxu0 0.0
    %1467 = vmatpush1.msra.mxu0 0.0
    %1468 = vmatprep.subr.mxu0 0.0
    %1469 = vmatpush1.msra.mxu0 0.0
    %1470 = vmatprep.subr.mxu0 0.0
    %1471 = vmatpush1.msra.mxu0 0.0
    %1472 = vmatprep.subr.mxu0 0.0
    %1473 = vmatpush1.msra.mxu0 0.0
    %1474 = vmatprep.subr.mxu0 0.0
    %1475 = vmatpush1.msra.mxu0 0.0
    %1476 = vmatprep.subr.mxu0 0.0
    %1477 = vmatpush1.msra.mxu0 0.0
    %1478 = vmatprep.subr.mxu0 0.0
    %1479 = vmatpush1.msra.mxu0 0.0
    %1480 = vmatprep.subr.mxu0 0.0
    %1481 = vmatpush1.msra.mxu0 0.0
    %1482 = vmatprep.subr.mxu0 0.0
    %1483 = vmatpush1.msra.mxu0 0.0
    %1484 = vmatprep.subr.mxu0 0.0
    %1485 = vmatpush1.msra.mxu0 0.0
    %1486 = vmatprep.subr.mxu0 0.0
    %1487 = vmatpush1.msra.mxu0 0.0
    %1488 = vmatprep.subr.mxu0 0.0
    %1489 = vmatpush1.msra.mxu0 0.0
    %1490 = vmatprep.subr.mxu0 0.0
    %1491 = vmatpush1.msra.mxu0 0.0
    %1492 = vmatprep.subr.mxu0 0.0
    %1493 = vmatpush1.msra.mxu0 0.0
    %1494 = vmatprep.subr.mxu0 0.0
    %1495 = vmatpush1.msra.mxu0 0.0
    %1496 = vmatprep.mubr.f32.mxu0 0.0
    %1497 = vmatmul.mubr.f32.gmra.mrb[0].mxu0 %v1430
    %v1498 = vpop.f32.mrb[0].mxu0
    %v1499 = vadd.f32 %v1427, %v1498
    %v1500 = vpop.f32.mrb[0].mxu0
    %1501 = vdwg.mxu0
    %1502 = vst [vmem:[#allocation3] sm:$0xff] %v1499
    // Predicated region
    $region26: #{tpu_custom_call.1} parent=1 // pred_check
      _
    $region27: #{tpu_custom_call.1} parent=1 // pred_check_branch
      %1504 = sbr.rel (0) target = $region29
    $region28: #{tpu_custom_call.1} parent=1 // pred_region
      %s1506 = ssub.s32 128, 128
      %1507 = vsyncadd [#allocation4], %s1506
      %s1509 = sshll.u32 [#allocation3], 4
      %s1510 = int_to_ptr.vmem [resolvable:$true] %s1509
      %1512 = dma.vmem_to_hbm [thread:$0]  %s1510, 128, %s6, [#allocation4]
    $region29: #{tpu_custom_call.1} parent=1 // pred_fallthru
      _
    // Predicated region
    $region30: #{tpu_custom_call.1} parent=1 // pred_check
      _
    $region31: #{tpu_custom_call.1} parent=1 // pred_check_branch
      %1514 = sbr.rel (0) target = $region33
    $region32: #{tpu_custom_call.1} parent=1 // pred_region
      %1515 = dma.done [#allocation4], 128
    $region33: #{tpu_custom_call.1} parent=1 // pred_fallthru
      _
    %1516 = vsyncpa [#allocation4], 1

</llo_original>
